<compile_context>
chip_gen: v7x
topology: tpu7x:2x2x1
jax: 0.10.0
libtpu: 0.0.40
codegen_flags: <defaults>
</compile_context>

<pallas_src>
import functools

import numpy as np
import jax
import jax.numpy as jnp
from jax.experimental import pallas as pl
from jax.experimental.pallas import tpu as pltpu


def _log_sigmoid(x):
    # stable log(sigmoid(x)) = -softplus(-x); both branches stay finite.
    return jnp.where(x >= 0, -jnp.log1p(jnp.exp(-x)), x - jnp.log1p(jnp.exp(x)))


def acf_loss_kernel(u_ref, it_ref, lat_ref, feat_ref, masks_ref,
                    w2u_ref, w2x_ref, w2_ref, w1x_ref, small_ref,
                    out_ref, *, b_total):
    """One grid step == b_tile users (users on sublanes, features on lanes).

    it_ref/lat_ref are (bt, N*H) with item j's embedding in lanes [j*H,(j+1)*H);
    feat_ref is (bt, N*F).  Per-item scalars (b_, a, alpha) are assembled as
    lane-dense (bt, N) rows so the item softmax is a last-axis reduce.
    """
    bt, h = u_ref.shape
    n_items = masks_ref.shape[1]
    f = w2x_ref.shape[0]
    half = n_items // 2

    u = u_ref[...]                                    # (bt, h)
    masks = masks_ref[...]                            # (bt, n)  [pos | neg]

    small = small_ref[...]                            # (8, 128) packed vectors
    w1u = small[0:1, :h]                              # (1, h)
    w1v = small[1:2, :h]
    w1p = small[2:3, :h]
    b1 = small[3:4, :n_items]                         # (1, n)
    w1 = small[4:5, :n_items]
    b2 = small[5:6, :f]                               # (1, f)

    w2u = w2u_ref[...]                                # (h, f)
    w2x = w2x_ref[...]                                # (f, f)
    w2 = w2_ref[...]                                  # (f, f)
    w1x = w1x_ref[...]                                # (n, n)

    # user-side terms, shared across items
    ub = jnp.dot(u, w2u, preferred_element_type=jnp.float32)      # (bt, f)
    u_term = jnp.sum(u * w1u, axis=-1, keepdims=True)             # (bt, 1)

    lane_n = jax.lax.broadcasted_iota(jnp.int32, (1, n_items), 1)  # (1, n)

    # ---- per-item pass: component-level attention b_ and a-term pieces ----
    b_row = jnp.zeros((bt, n_items), jnp.float32)    # b_ with items on lanes
    vp_row = jnp.zeros((bt, n_items), jnp.float32)   # it@W_1v + lat@W_1p
    for j in range(n_items):                          # static unroll (small N)
        feat_j = feat_ref[:, j * f:(j + 1) * f]                    # (bt, f)
        it_j = it_ref[:, j * h:(j + 1) * h]                        # (bt, h)
        lat_j = lat_ref[:, j * h:(j + 1) * h]                      # (bt, h)

        bb = jnp.dot(feat_j, w2x, preferred_element_type=jnp.float32) + ub + b2
        bb = jnp.dot(bb, w2, preferred_element_type=jnp.float32)   # (bt, f)
        bb_max = jnp.max(bb, axis=-1, keepdims=True)
        e = jnp.exp(bb - bb_max)
        b_pro = e / jnp.sum(e, axis=-1, keepdims=True)             # softmax / F
        b_j = jnp.sum(bb * b_pro, axis=-1, keepdims=True)          # (bt, 1)

        vp_j = (jnp.sum(it_j * w1v, axis=-1, keepdims=True)
                + jnp.sum(lat_j * w1p, axis=-1, keepdims=True))    # (bt, 1)

        # place the per-item columns at lane j (lane-dense item axis)
        b_row = jnp.where(lane_n == j, b_j, b_row)
        vp_row = jnp.where(lane_n == j, vp_j, vp_row)

    # ---- item-level attention, softmax over the item (lane) axis ----------
    bx = jnp.dot(b_row, w1x, preferred_element_type=jnp.float32)   # (bt, n)
    a = (u_term + vp_row + bx + b1) * w1                           # (bt, n)
    a_max = jnp.max(a, axis=-1, keepdims=True)
    ea = jnp.exp(a - a_max)
    alpha = ea / jnp.sum(ea, axis=-1, keepdims=True)               # (bt, n)

    # sum_p = u + sum_j alpha_j * latent_j
    sum_p = u
    for j in range(n_items):
        lat_j = lat_ref[:, j * h:(j + 1) * h]
        sum_p = sum_p + alpha[:, j:j + 1] * lat_j                  # (bt, h)

    # ---- BPR-style pairwise loss ------------------------------------------
    loss_col = jnp.zeros((bt, 1), jnp.float32)
    for j in range(half):
        it_pos = it_ref[:, j * h:(j + 1) * h]
        it_neg = it_ref[:, (half + j) * h:(half + j + 1) * h]
        pos_sc = jnp.sum(sum_p * it_pos, axis=-1, keepdims=True)   # (bt, 1)
        neg_sc = jnp.sum(sum_p * it_neg, axis=-1, keepdims=True)
        x = (pos_sc * masks[:, j:j + 1]
             - neg_sc * masks[:, half + j:half + j + 1])
        loss_col = loss_col + _log_sigmoid(x)

    # zero the padded batch rows of this tile
    rows = (pl.program_id(0) * bt
            + jax.lax.broadcasted_iota(jnp.int32, (bt, 1), 0))
    valid = (rows < b_total).astype(jnp.float32)
    out_ref[...] = -(loss_col * valid)                             # (bt, 1)


def acf_forward(params, users, pos_items, pos_feature, neg_items, neg_feature,
                *, b_tile=128):
    ue = params["user_embed"]
    ie = params["item_embed"]
    il = params["item_embed_latent"]

    B = users.shape[0]
    L = pos_items.shape[1]
    N = 2 * L
    H = ue.shape[1]
    F_ = pos_feature.shape[-1]

    # adapt the user tile to the batch (multiple of 8 sublanes, <= b_tile)
    b_tile = int(min(b_tile, max(8, -(-B // 8) * 8)))
    num_tiles = -(-B // b_tile)
    B_pad = num_tiles * b_tile
    pad = B_pad - B

    # ---- XLA glue: gathers / concat / layout plumbing ----------------------
    # TODO(synk): the embedding gathers could be moved in-kernel (scalar
    # prefetch + manual DMA) to halve HBM traffic for the item tensors.
    u = ue[users]                                                       # (B, H)
    it = jnp.concatenate([ie[pos_items], ie[neg_items]], axis=1)        # (B,N,H)
    lat = jnp.concatenate([il[pos_items], il[neg_items]], axis=1)       # (B,N,H)
    feat = jnp.concatenate([pos_feature, neg_feature], axis=1)          # (B,N,F)
    masks = jnp.concatenate([(pos_items > 0).astype(jnp.float32),
                             (neg_items > 0).astype(jnp.float32)],
                            axis=1)                                     # (B, N)

    it_w = it.reshape(B, N * H)
    lat_w = lat.reshape(B, N * H)
    feat_w = feat.reshape(B, N * F_)

    if pad:
        u = jnp.pad(u, ((0, pad), (0, 0)))
        it_w = jnp.pad(it_w, ((0, pad), (0, 0)))
        lat_w = jnp.pad(lat_w, ((0, pad), (0, 0)))
        feat_w = jnp.pad(feat_w, ((0, pad), (0, 0)))
        masks = jnp.pad(masks, ((0, pad), (0, 0)))

    # pack the six tiny parameter vectors into a single (8, 128) block
    w_pack = max(128, H, F_, N)
    small = jnp.zeros((8, w_pack), jnp.float32)
    small = small.at[0, :H].set(params["W_1u"].reshape(H))
    small = small.at[1, :H].set(params["W_1v"].reshape(H))
    small = small.at[2, :H].set(params["W_1p"].reshape(H))
    small = small.at[3, :N].set(params["b1"].reshape(N))
    small = small.at[4, :N].set(params["W1"].reshape(N))
    small = small.at[5, :F_].set(params["b2"].reshape(F_))

    kernel = functools.partial(acf_loss_kernel, b_total=B)

    def data_spec(width):
        return pl.BlockSpec((b_tile, width), lambda i: (i, 0))

    def param_spec(arr):
        return pl.BlockSpec(arr.shape, lambda i: (0, 0))

    per_user = pl.pallas_call(
        kernel,
        out_shape=jax.ShapeDtypeStruct((B_pad, 1), jnp.float32),
        grid=(num_tiles,),
        in_specs=[
            data_spec(H),            # u
            data_spec(N * H),        # item embeddings  (pos ++ neg)
            data_spec(N * H),        # latent item embeddings
            data_spec(N * F_),       # item features
            data_spec(N),            # [pos_mask | neg_mask]
            param_spec(params["W_2u"]),
            param_spec(params["W_2x"]),
            param_spec(params["W2"]),
            param_spec(params["W_1x"]),
            param_spec(small),
        ],
        out_specs=pl.BlockSpec((b_tile, 1), lambda i: (i, 0)),
        compiler_params=pltpu.CompilerParams(
            dimension_semantics=("parallel",)),
    )(u, it_w, lat_w, feat_w, masks,
      params["W_2u"], params["W_2x"], params["W2"], params["W_1x"], small)

    loss = jnp.sum(per_user)

    # Frobenius-norm regularizer: trivial reduction, plain JAX per perf review
    # (an untiled in-VMEM Pallas version would not scale to real vocab sizes).
    lambdas = 0.5
    regular = lambdas * (jnp.linalg.norm(ue) + jnp.linalg.norm(ie)
                         + jnp.linalg.norm(il))
    return loss + regular


if __name__ == "__main__":
    # m users, n items, hid_dim, f_dim; batch of B users, each with n//2
    # positive and n//2 negative items (so the concatenated item list has
    # length n, matching the declared shapes of W_1x, b1, W1).
    m, n, hid_dim, f_dim = 10, 8, 32, 16
    B = 4
    L = n // 2

    key = jax.random.PRNGKey(0)
    keys = jax.random.split(key, 18)
    s = 0.1
    params = {
        "user_embed":        jax.random.normal(keys[0], (m, hid_dim), jnp.float32) * s,
        "item_embed":        jax.random.normal(keys[1], (n, hid_dim), jnp.float32) * s,
        "item_embed_latent": jax.random.normal(keys[2], (n, hid_dim), jnp.float32) * s,
        "W_2u": jax.random.normal(keys[3], (hid_dim, f_dim), jnp.float32) * s,
        "W_1u": jax.random.normal(keys[4], (hid_dim, 1), jnp.float32) * s,
        "W_2x": jax.random.normal(keys[5], (f_dim, f_dim), jnp.float32) * s,
        "W_1x": jax.random.normal(keys[6], (n, n), jnp.float32) * s,
        "W_1v": jax.random.normal(keys[7], (hid_dim, 1), jnp.float32) * s,
        "W_1p": jax.random.normal(keys[8], (hid_dim, 1), jnp.float32) * s,
        "b2":   jax.random.normal(keys[9], (f_dim,), jnp.float32) * s,
        "b1":   jax.random.normal(keys[10], (n,), jnp.float32) * s,
        "W2":   jax.random.normal(keys[11], (f_dim, f_dim), jnp.float32) * s,
        "W1":   jax.random.normal(keys[12], (n,), jnp.float32) * s,
    }

    users = jax.random.randint(keys[13], (B,), 0, m)
    pos_items = jax.random.randint(keys[14], (B, L), 0, n)
    neg_items = jax.random.randint(keys[15], (B, L), 0, n)
    pos_feature = jax.random.normal(keys[16], (B, L, f_dim), jnp.float32) * s
    neg_feature = jax.random.normal(keys[17], (B, L, f_dim), jnp.float32) * s

    out = jax.jit(acf_forward)(params, users, pos_items, pos_feature,
                               neg_items, neg_feature)
    out = jax.block_until_ready(out)
    assert np.isfinite(np.asarray(out)), "non-finite loss"
    print("KERNEL_OK")
</pallas_src>

<mosaic_0001>
module attributes {stable_mosaic.version = 11 : i64} {
  func.func @acf_loss_kernel(%arg0: i32, %arg1: memref<8x32xf32, #tpu.memory_space<vmem>>, %arg2: memref<8x256xf32, #tpu.memory_space<vmem>>, %arg3: memref<8x256xf32, #tpu.memory_space<vmem>>, %arg4: memref<8x128xf32, #tpu.memory_space<vmem>>, %arg5: memref<8x8xf32, #tpu.memory_space<vmem>>, %arg6: memref<32x16xf32, #tpu.memory_space<vmem>>, %arg7: memref<16x16xf32, #tpu.memory_space<vmem>>, %arg8: memref<16x16xf32, #tpu.memory_space<vmem>>, %arg9: memref<8x8xf32, #tpu.memory_space<vmem>>, %arg10: memref<8x128xf32, #tpu.memory_space<vmem>>, %arg11: memref<8x1xf32, #tpu.memory_space<vmem>>) attributes {dimension_semantics = [#tpu.dimension_semantics<parallel>], iteration_bounds = array<i64: 1>, scalar_prefetch = 0 : i64, scratch_operands = 0 : i64, tpu.core_type = #tpu.core_type<tc>, window_params = [{transform_indices = @transform_0, window_bounds = array<i64: 8, 32>}, {transform_indices = @transform_1, window_bounds = array<i64: 8, 256>}, {transform_indices = @transform_2, window_bounds = array<i64: 8, 256>}, {transform_indices = @transform_3, window_bounds = array<i64: 8, 128>}, {transform_indices = @transform_4, window_bounds = array<i64: 8, 8>}, {pipeline_mode = #tpu.pipeline_mode<synchronous>, transform_indices = @transform_5, window_bounds = array<i64: 32, 16>}, {pipeline_mode = #tpu.pipeline_mode<synchronous>, transform_indices = @transform_6, window_bounds = array<i64: 16, 16>}, {pipeline_mode = #tpu.pipeline_mode<synchronous>, transform_indices = @transform_7, window_bounds = array<i64: 16, 16>}, {pipeline_mode = #tpu.pipeline_mode<synchronous>, transform_indices = @transform_8, window_bounds = array<i64: 8, 8>}, {pipeline_mode = #tpu.pipeline_mode<synchronous>, transform_indices = @transform_9, window_bounds = array<i64: 8, 128>}, {transform_indices = @transform_10, window_bounds = array<i64: 8, 1>}]} {
    %c0 = arith.constant 0 : index
    %c0_0 = arith.constant 0 : index
    %0 = vector.load %arg1[%c0, %c0_0] : memref<8x32xf32, #tpu.memory_space<vmem>>, vector<8x32xf32>
    %c0_1 = arith.constant 0 : index
    %c0_2 = arith.constant 0 : index
    %1 = vector.load %arg5[%c0_1, %c0_2] : memref<8x8xf32, #tpu.memory_space<vmem>>, vector<8x8xf32>
    %c0_3 = arith.constant 0 : index
    %c0_4 = arith.constant 0 : index
    %2 = vector.load %arg10[%c0_3, %c0_4] : memref<8x128xf32, #tpu.memory_space<vmem>>, vector<8x128xf32>
    %3 = vector.extract_strided_slice %2 {offsets = [0, 0], sizes = [1, 32], strides = [1, 1]} : vector<8x128xf32> to vector<1x32xf32>
    %4 = vector.extract_strided_slice %2 {offsets = [1, 0], sizes = [1, 32], strides = [1, 1]} : vector<8x128xf32> to vector<1x32xf32>
    %5 = vector.extract_strided_slice %2 {offsets = [2, 0], sizes = [1, 32], strides = [1, 1]} : vector<8x128xf32> to vector<1x32xf32>
    %6 = vector.extract_strided_slice %2 {offsets = [3, 0], sizes = [1, 8], strides = [1, 1]} : vector<8x128xf32> to vector<1x8xf32>
    %7 = vector.extract_strided_slice %2 {offsets = [4, 0], sizes = [1, 8], strides = [1, 1]} : vector<8x128xf32> to vector<1x8xf32>
    %8 = vector.extract_strided_slice %2 {offsets = [5, 0], sizes = [1, 16], strides = [1, 1]} : vector<8x128xf32> to vector<1x16xf32>
    %c0_5 = arith.constant 0 : index
    %c0_6 = arith.constant 0 : index
    %9 = vector.load %arg6[%c0_5, %c0_6] : memref<32x16xf32, #tpu.memory_space<vmem>>, vector<32x16xf32>
    %c0_7 = arith.constant 0 : index
    %c0_8 = arith.constant 0 : index
    %10 = vector.load %arg7[%c0_7, %c0_8] : memref<16x16xf32, #tpu.memory_space<vmem>>, vector<16x16xf32>
    %c0_9 = arith.constant 0 : index
    %c0_10 = arith.constant 0 : index
    %11 = vector.load %arg8[%c0_9, %c0_10] : memref<16x16xf32, #tpu.memory_space<vmem>>, vector<16x16xf32>
    %c0_11 = arith.constant 0 : index
    %c0_12 = arith.constant 0 : index
    %12 = vector.load %arg9[%c0_11, %c0_12] : memref<8x8xf32, #tpu.memory_space<vmem>>, vector<8x8xf32>
    %cst = arith.constant dense<0.000000e+00> : vector<8x16xf32>
    %13 = tpu.matmul %0, %9, %cst {dimension_numbers = #tpu.dot_dimension_numbers<[1], [0], [0], [1], [0, 0, 1, 1], [], []>} : vector<8x32xf32>, vector<32x16xf32>, vector<8x16xf32> -> vector<8x16xf32>
    %14 = vector.broadcast %3 : vector<1x32xf32> to vector<8x32xf32>
    %15 = arith.mulf %0, %14 : vector<8x32xf32>
    %cst_13 = arith.constant dense<0.000000e+00> : vector<8xf32>
    %16 = vector.multi_reduction <add>, %15, %cst_13 [1] : vector<8x32xf32> to vector<8xf32>
    %17 = vector.shape_cast %16 : vector<8xf32> to vector<8x1xf32>
    %18 = tpu.iota {dimensions = array<i32: 1>} : vector<1x8xi32>
    %cst_14 = arith.constant 0.000000e+00 : f32
    %19 = vector.broadcast %cst_14 : f32 to vector<8x8xf32>
    %cst_15 = arith.constant 0.000000e+00 : f32
    %20 = vector.broadcast %cst_15 : f32 to vector<8x8xf32>
    %c0_16 = arith.constant 0 : index
    %c0_17 = arith.constant 0 : index
    %21 = vector.load %arg4[%c0_16, %c0_17] : memref<8x128xf32, #tpu.memory_space<vmem>>, vector<8x16xf32>
    %c0_18 = arith.constant 0 : index
    %c0_19 = arith.constant 0 : index
    %22 = vector.load %arg2[%c0_18, %c0_19] : memref<8x256xf32, #tpu.memory_space<vmem>>, vector<8x32xf32>
    %c0_20 = arith.constant 0 : index
    %c0_21 = arith.constant 0 : index
    %23 = vector.load %arg3[%c0_20, %c0_21] : memref<8x256xf32, #tpu.memory_space<vmem>>, vector<8x32xf32>
    %cst_22 = arith.constant dense<0.000000e+00> : vector<8x16xf32>
    %24 = tpu.matmul %21, %10, %cst_22 {dimension_numbers = #tpu.dot_dimension_numbers<[1], [0], [0], [1], [0, 0, 1, 1], [], []>} : vector<8x16xf32>, vector<16x16xf32>, vector<8x16xf32> -> vector<8x16xf32>
    %25 = arith.addf %24, %13 : vector<8x16xf32>
    %26 = vector.broadcast %8 : vector<1x16xf32> to vector<8x16xf32>
    %27 = arith.addf %25, %26 : vector<8x16xf32>
    %cst_23 = arith.constant dense<0.000000e+00> : vector<8x16xf32>
    %28 = tpu.matmul %27, %11, %cst_23 {dimension_numbers = #tpu.dot_dimension_numbers<[1], [0], [0], [1], [0, 0, 1, 1], [], []>} : vector<8x16xf32>, vector<16x16xf32>, vector<8x16xf32> -> vector<8x16xf32>
    %cst_24 = arith.constant dense<0xFF800000> : vector<8xf32>
    %29 = vector.multi_reduction <maximumf>, %28, %cst_24 [1] : vector<8x16xf32> to vector<8xf32>
    %30 = vector.shape_cast %29 : vector<8xf32> to vector<8x1xf32>
    %31 = vector.broadcast %30 : vector<8x1xf32> to vector<8x16xf32>
    %32 = arith.subf %28, %31 : vector<8x16xf32>
    %33 = math.exp %32 : vector<8x16xf32>
    %cst_25 = arith.constant dense<0.000000e+00> : vector<8xf32>
    %34 = vector.multi_reduction <add>, %33, %cst_25 [1] : vector<8x16xf32> to vector<8xf32>
    %35 = vector.shape_cast %34 : vector<8xf32> to vector<8x1xf32>
    %36 = vector.broadcast %35 : vector<8x1xf32> to vector<8x16xf32>
    %37 = arith.divf %33, %36 : vector<8x16xf32>
    %38 = arith.mulf %28, %37 : vector<8x16xf32>
    %cst_26 = arith.constant dense<0.000000e+00> : vector<8xf32>
    %39 = vector.multi_reduction <add>, %38, %cst_26 [1] : vector<8x16xf32> to vector<8xf32>
    %40 = vector.shape_cast %39 : vector<8xf32> to vector<8x1xf32>
    %41 = vector.broadcast %4 : vector<1x32xf32> to vector<8x32xf32>
    %42 = arith.mulf %22, %41 : vector<8x32xf32>
    %cst_27 = arith.constant dense<0.000000e+00> : vector<8xf32>
    %43 = vector.multi_reduction <add>, %42, %cst_27 [1] : vector<8x32xf32> to vector<8xf32>
    %44 = vector.shape_cast %43 : vector<8xf32> to vector<8x1xf32>
    %45 = vector.broadcast %5 : vector<1x32xf32> to vector<8x32xf32>
    %46 = arith.mulf %23, %45 : vector<8x32xf32>
    %cst_28 = arith.constant dense<0.000000e+00> : vector<8xf32>
    %47 = vector.multi_reduction <add>, %46, %cst_28 [1] : vector<8x32xf32> to vector<8xf32>
    %48 = vector.shape_cast %47 : vector<8xf32> to vector<8x1xf32>
    %49 = arith.addf %44, %48 : vector<8x1xf32>
    %c0_i32 = arith.constant 0 : i32
    %50 = vector.broadcast %c0_i32 : i32 to vector<1x8xi32>
    %51 = arith.cmpi eq, %18, %50 : vector<1x8xi32>
    %52 = vector.shape_cast %51 : vector<1x8xi1> to vector<1x8xi1>
    %53 = vector.broadcast %52 : vector<1x8xi1> to vector<8x8xi1>
    %54 = vector.shape_cast %40 : vector<8x1xf32> to vector<8x1xf32>
    %55 = vector.broadcast %54 : vector<8x1xf32> to vector<8x8xf32>
    %56 = arith.select %53, %55, %19 : vector<8x8xi1>, vector<8x8xf32>
    %c0_i32_29 = arith.constant 0 : i32
    %57 = vector.broadcast %c0_i32_29 : i32 to vector<1x8xi32>
    %58 = arith.cmpi eq, %18, %57 : vector<1x8xi32>
    %59 = vector.shape_cast %58 : vector<1x8xi1> to vector<1x8xi1>
    %60 = vector.broadcast %59 : vector<1x8xi1> to vector<8x8xi1>
    %61 = vector.shape_cast %49 : vector<8x1xf32> to vector<8x1xf32>
    %62 = vector.broadcast %61 : vector<8x1xf32> to vector<8x8xf32>
    %63 = arith.select %60, %62, %20 : vector<8x8xi1>, vector<8x8xf32>
    %c0_30 = arith.constant 0 : index
    %c16 = arith.constant 16 : index
    %64 = vector.load %arg4[%c0_30, %c16] : memref<8x128xf32, #tpu.memory_space<vmem>>, vector<8x16xf32>
    %c0_31 = arith.constant 0 : index
    %c32 = arith.constant 32 : index
    %65 = vector.load %arg2[%c0_31, %c32] : memref<8x256xf32, #tpu.memory_space<vmem>>, vector<8x32xf32>
    %c0_32 = arith.constant 0 : index
    %c32_33 = arith.constant 32 : index
    %66 = vector.load %arg3[%c0_32, %c32_33] : memref<8x256xf32, #tpu.memory_space<vmem>>, vector<8x32xf32>
    %cst_34 = arith.constant dense<0.000000e+00> : vector<8x16xf32>
    %67 = tpu.matmul %64, %10, %cst_34 {dimension_numbers = #tpu.dot_dimension_numbers<[1], [0], [0], [1], [0, 0, 1, 1], [], []>} : vector<8x16xf32>, vector<16x16xf32>, vector<8x16xf32> -> vector<8x16xf32>
    %68 = arith.addf %67, %13 : vector<8x16xf32>
    %69 = vector.broadcast %8 : vector<1x16xf32> to vector<8x16xf32>
    %70 = arith.addf %68, %69 : vector<8x16xf32>
    %cst_35 = arith.constant dense<0.000000e+00> : vector<8x16xf32>
    %71 = tpu.matmul %70, %11, %cst_35 {dimension_numbers = #tpu.dot_dimension_numbers<[1], [0], [0], [1], [0, 0, 1, 1], [], []>} : vector<8x16xf32>, vector<16x16xf32>, vector<8x16xf32> -> vector<8x16xf32>
    %cst_36 = arith.constant dense<0xFF800000> : vector<8xf32>
    %72 = vector.multi_reduction <maximumf>, %71, %cst_36 [1] : vector<8x16xf32> to vector<8xf32>
    %73 = vector.shape_cast %72 : vector<8xf32> to vector<8x1xf32>
    %74 = vector.broadcast %73 : vector<8x1xf32> to vector<8x16xf32>
    %75 = arith.subf %71, %74 : vector<8x16xf32>
    %76 = math.exp %75 : vector<8x16xf32>
    %cst_37 = arith.constant dense<0.000000e+00> : vector<8xf32>
    %77 = vector.multi_reduction <add>, %76, %cst_37 [1] : vector<8x16xf32> to vector<8xf32>
    %78 = vector.shape_cast %77 : vector<8xf32> to vector<8x1xf32>
    %79 = vector.broadcast %78 : vector<8x1xf32> to vector<8x16xf32>
    %80 = arith.divf %76, %79 : vector<8x16xf32>
    %81 = arith.mulf %71, %80 : vector<8x16xf32>
    %cst_38 = arith.constant dense<0.000000e+00> : vector<8xf32>
    %82 = vector.multi_reduction <add>, %81, %cst_38 [1] : vector<8x16xf32> to vector<8xf32>
    %83 = vector.shape_cast %82 : vector<8xf32> to vector<8x1xf32>
    %84 = vector.broadcast %4 : vector<1x32xf32> to vector<8x32xf32>
    %85 = arith.mulf %65, %84 : vector<8x32xf32>
    %cst_39 = arith.constant dense<0.000000e+00> : vector<8xf32>
    %86 = vector.multi_reduction <add>, %85, %cst_39 [1] : vector<8x32xf32> to vector<8xf32>
    %87 = vector.shape_cast %86 : vector<8xf32> to vector<8x1xf32>
    %88 = vector.broadcast %5 : vector<1x32xf32> to vector<8x32xf32>
    %89 = arith.mulf %66, %88 : vector<8x32xf32>
    %cst_40 = arith.constant dense<0.000000e+00> : vector<8xf32>
    %90 = vector.multi_reduction <add>, %89, %cst_40 [1] : vector<8x32xf32> to vector<8xf32>
    %91 = vector.shape_cast %90 : vector<8xf32> to vector<8x1xf32>
    %92 = arith.addf %87, %91 : vector<8x1xf32>
    %c1_i32 = arith.constant 1 : i32
    %93 = vector.broadcast %c1_i32 : i32 to vector<1x8xi32>
    %94 = arith.cmpi eq, %18, %93 : vector<1x8xi32>
    %95 = vector.shape_cast %94 : vector<1x8xi1> to vector<1x8xi1>
    %96 = vector.broadcast %95 : vector<1x8xi1> to vector<8x8xi1>
    %97 = vector.shape_cast %83 : vector<8x1xf32> to vector<8x1xf32>
    %98 = vector.broadcast %97 : vector<8x1xf32> to vector<8x8xf32>
    %99 = arith.select %96, %98, %56 : vector<8x8xi1>, vector<8x8xf32>
    %c1_i32_41 = arith.constant 1 : i32
    %100 = vector.broadcast %c1_i32_41 : i32 to vector<1x8xi32>
    %101 = arith.cmpi eq, %18, %100 : vector<1x8xi32>
    %102 = vector.shape_cast %101 : vector<1x8xi1> to vector<1x8xi1>
    %103 = vector.broadcast %102 : vector<1x8xi1> to vector<8x8xi1>
    %104 = vector.shape_cast %92 : vector<8x1xf32> to vector<8x1xf32>
    %105 = vector.broadcast %104 : vector<8x1xf32> to vector<8x8xf32>
    %106 = arith.select %103, %105, %63 : vector<8x8xi1>, vector<8x8xf32>
    %c0_42 = arith.constant 0 : index
    %c32_43 = arith.constant 32 : index
    %107 = vector.load %arg4[%c0_42, %c32_43] : memref<8x128xf32, #tpu.memory_space<vmem>>, vector<8x16xf32>
    %c0_44 = arith.constant 0 : index
    %c64 = arith.constant 64 : index
    %108 = vector.load %arg2[%c0_44, %c64] : memref<8x256xf32, #tpu.memory_space<vmem>>, vector<8x32xf32>
    %c0_45 = arith.constant 0 : index
    %c64_46 = arith.constant 64 : index
    %109 = vector.load %arg3[%c0_45, %c64_46] : memref<8x256xf32, #tpu.memory_space<vmem>>, vector<8x32xf32>
    %cst_47 = arith.constant dense<0.000000e+00> : vector<8x16xf32>
    %110 = tpu.matmul %107, %10, %cst_47 {dimension_numbers = #tpu.dot_dimension_numbers<[1], [0], [0], [1], [0, 0, 1, 1], [], []>} : vector<8x16xf32>, vector<16x16xf32>, vector<8x16xf32> -> vector<8x16xf32>
    %111 = arith.addf %110, %13 : vector<8x16xf32>
    %112 = vector.broadcast %8 : vector<1x16xf32> to vector<8x16xf32>
    %113 = arith.addf %111, %112 : vector<8x16xf32>
    %cst_48 = arith.constant dense<0.000000e+00> : vector<8x16xf32>
    %114 = tpu.matmul %113, %11, %cst_48 {dimension_numbers = #tpu.dot_dimension_numbers<[1], [0], [0], [1], [0, 0, 1, 1], [], []>} : vector<8x16xf32>, vector<16x16xf32>, vector<8x16xf32> -> vector<8x16xf32>
    %cst_49 = arith.constant dense<0xFF800000> : vector<8xf32>
    %115 = vector.multi_reduction <maximumf>, %114, %cst_49 [1] : vector<8x16xf32> to vector<8xf32>
    %116 = vector.shape_cast %115 : vector<8xf32> to vector<8x1xf32>
    %117 = vector.broadcast %116 : vector<8x1xf32> to vector<8x16xf32>
    %118 = arith.subf %114, %117 : vector<8x16xf32>
    %119 = math.exp %118 : vector<8x16xf32>
    %cst_50 = arith.constant dense<0.000000e+00> : vector<8xf32>
    %120 = vector.multi_reduction <add>, %119, %cst_50 [1] : vector<8x16xf32> to vector<8xf32>
    %121 = vector.shape_cast %120 : vector<8xf32> to vector<8x1xf32>
    %122 = vector.broadcast %121 : vector<8x1xf32> to vector<8x16xf32>
    %123 = arith.divf %119, %122 : vector<8x16xf32>
    %124 = arith.mulf %114, %123 : vector<8x16xf32>
    %cst_51 = arith.constant dense<0.000000e+00> : vector<8xf32>
    %125 = vector.multi_reduction <add>, %124, %cst_51 [1] : vector<8x16xf32> to vector<8xf32>
    %126 = vector.shape_cast %125 : vector<8xf32> to vector<8x1xf32>
    %127 = vector.broadcast %4 : vector<1x32xf32> to vector<8x32xf32>
    %128 = arith.mulf %108, %127 : vector<8x32xf32>
    %cst_52 = arith.constant dense<0.000000e+00> : vector<8xf32>
    %129 = vector.multi_reduction <add>, %128, %cst_52 [1] : vector<8x32xf32> to vector<8xf32>
    %130 = vector.shape_cast %129 : vector<8xf32> to vector<8x1xf32>
    %131 = vector.broadcast %5 : vector<1x32xf32> to vector<8x32xf32>
    %132 = arith.mulf %109, %131 : vector<8x32xf32>
    %cst_53 = arith.constant dense<0.000000e+00> : vector<8xf32>
    %133 = vector.multi_reduction <add>, %132, %cst_53 [1] : vector<8x32xf32> to vector<8xf32>
    %134 = vector.shape_cast %133 : vector<8xf32> to vector<8x1xf32>
    %135 = arith.addf %130, %134 : vector<8x1xf32>
    %c2_i32 = arith.constant 2 : i32
    %136 = vector.broadcast %c2_i32 : i32 to vector<1x8xi32>
    %137 = arith.cmpi eq, %18, %136 : vector<1x8xi32>
    %138 = vector.shape_cast %137 : vector<1x8xi1> to vector<1x8xi1>
    %139 = vector.broadcast %138 : vector<1x8xi1> to vector<8x8xi1>
    %140 = vector.shape_cast %126 : vector<8x1xf32> to vector<8x1xf32>
    %141 = vector.broadcast %140 : vector<8x1xf32> to vector<8x8xf32>
    %142 = arith.select %139, %141, %99 : vector<8x8xi1>, vector<8x8xf32>
    %c2_i32_54 = arith.constant 2 : i32
    %143 = vector.broadcast %c2_i32_54 : i32 to vector<1x8xi32>
    %144 = arith.cmpi eq, %18, %143 : vector<1x8xi32>
    %145 = vector.shape_cast %144 : vector<1x8xi1> to vector<1x8xi1>
    %146 = vector.broadcast %145 : vector<1x8xi1> to vector<8x8xi1>
    %147 = vector.shape_cast %135 : vector<8x1xf32> to vector<8x1xf32>
    %148 = vector.broadcast %147 : vector<8x1xf32> to vector<8x8xf32>
    %149 = arith.select %146, %148, %106 : vector<8x8xi1>, vector<8x8xf32>
    %c0_55 = arith.constant 0 : index
    %c48 = arith.constant 48 : index
    %150 = vector.load %arg4[%c0_55, %c48] : memref<8x128xf32, #tpu.memory_space<vmem>>, vector<8x16xf32>
    %c0_56 = arith.constant 0 : index
    %c96 = arith.constant 96 : index
    %151 = vector.load %arg2[%c0_56, %c96] : memref<8x256xf32, #tpu.memory_space<vmem>>, vector<8x32xf32>
    %c0_57 = arith.constant 0 : index
    %c96_58 = arith.constant 96 : index
    %152 = vector.load %arg3[%c0_57, %c96_58] : memref<8x256xf32, #tpu.memory_space<vmem>>, vector<8x32xf32>
    %cst_59 = arith.constant dense<0.000000e+00> : vector<8x16xf32>
    %153 = tpu.matmul %150, %10, %cst_59 {dimension_numbers = #tpu.dot_dimension_numbers<[1], [0], [0], [1], [0, 0, 1, 1], [], []>} : vector<8x16xf32>, vector<16x16xf32>, vector<8x16xf32> -> vector<8x16xf32>
    %154 = arith.addf %153, %13 : vector<8x16xf32>
    %155 = vector.broadcast %8 : vector<1x16xf32> to vector<8x16xf32>
    %156 = arith.addf %154, %155 : vector<8x16xf32>
    %cst_60 = arith.constant dense<0.000000e+00> : vector<8x16xf32>
    %157 = tpu.matmul %156, %11, %cst_60 {dimension_numbers = #tpu.dot_dimension_numbers<[1], [0], [0], [1], [0, 0, 1, 1], [], []>} : vector<8x16xf32>, vector<16x16xf32>, vector<8x16xf32> -> vector<8x16xf32>
    %cst_61 = arith.constant dense<0xFF800000> : vector<8xf32>
    %158 = vector.multi_reduction <maximumf>, %157, %cst_61 [1] : vector<8x16xf32> to vector<8xf32>
    %159 = vector.shape_cast %158 : vector<8xf32> to vector<8x1xf32>
    %160 = vector.broadcast %159 : vector<8x1xf32> to vector<8x16xf32>
    %161 = arith.subf %157, %160 : vector<8x16xf32>
    %162 = math.exp %161 : vector<8x16xf32>
    %cst_62 = arith.constant dense<0.000000e+00> : vector<8xf32>
    %163 = vector.multi_reduction <add>, %162, %cst_62 [1] : vector<8x16xf32> to vector<8xf32>
    %164 = vector.shape_cast %163 : vector<8xf32> to vector<8x1xf32>
    %165 = vector.broadcast %164 : vector<8x1xf32> to vector<8x16xf32>
    %166 = arith.divf %162, %165 : vector<8x16xf32>
    %167 = arith.mulf %157, %166 : vector<8x16xf32>
    %cst_63 = arith.constant dense<0.000000e+00> : vector<8xf32>
    %168 = vector.multi_reduction <add>, %167, %cst_63 [1] : vector<8x16xf32> to vector<8xf32>
    %169 = vector.shape_cast %168 : vector<8xf32> to vector<8x1xf32>
    %170 = vector.broadcast %4 : vector<1x32xf32> to vector<8x32xf32>
    %171 = arith.mulf %151, %170 : vector<8x32xf32>
    %cst_64 = arith.constant dense<0.000000e+00> : vector<8xf32>
    %172 = vector.multi_reduction <add>, %171, %cst_64 [1] : vector<8x32xf32> to vector<8xf32>
    %173 = vector.shape_cast %172 : vector<8xf32> to vector<8x1xf32>
    %174 = vector.broadcast %5 : vector<1x32xf32> to vector<8x32xf32>
    %175 = arith.mulf %152, %174 : vector<8x32xf32>
    %cst_65 = arith.constant dense<0.000000e+00> : vector<8xf32>
    %176 = vector.multi_reduction <add>, %175, %cst_65 [1] : vector<8x32xf32> to vector<8xf32>
    %177 = vector.shape_cast %176 : vector<8xf32> to vector<8x1xf32>
    %178 = arith.addf %173, %177 : vector<8x1xf32>
    %c3_i32 = arith.constant 3 : i32
    %179 = vector.broadcast %c3_i32 : i32 to vector<1x8xi32>
    %180 = arith.cmpi eq, %18, %179 : vector<1x8xi32>
    %181 = vector.shape_cast %180 : vector<1x8xi1> to vector<1x8xi1>
    %182 = vector.broadcast %181 : vector<1x8xi1> to vector<8x8xi1>
    %183 = vector.shape_cast %169 : vector<8x1xf32> to vector<8x1xf32>
    %184 = vector.broadcast %183 : vector<8x1xf32> to vector<8x8xf32>
    %185 = arith.select %182, %184, %142 : vector<8x8xi1>, vector<8x8xf32>
    %c3_i32_66 = arith.constant 3 : i32
    %186 = vector.broadcast %c3_i32_66 : i32 to vector<1x8xi32>
    %187 = arith.cmpi eq, %18, %186 : vector<1x8xi32>
    %188 = vector.shape_cast %187 : vector<1x8xi1> to vector<1x8xi1>
    %189 = vector.broadcast %188 : vector<1x8xi1> to vector<8x8xi1>
    %190 = vector.shape_cast %178 : vector<8x1xf32> to vector<8x1xf32>
    %191 = vector.broadcast %190 : vector<8x1xf32> to vector<8x8xf32>
    %192 = arith.select %189, %191, %149 : vector<8x8xi1>, vector<8x8xf32>
    %c0_67 = arith.constant 0 : index
    %c64_68 = arith.constant 64 : index
    %193 = vector.load %arg4[%c0_67, %c64_68] : memref<8x128xf32, #tpu.memory_space<vmem>>, vector<8x16xf32>
    %c0_69 = arith.constant 0 : index
    %c128 = arith.constant 128 : index
    %194 = vector.load %arg2[%c0_69, %c128] : memref<8x256xf32, #tpu.memory_space<vmem>>, vector<8x32xf32>
    %c0_70 = arith.constant 0 : index
    %c128_71 = arith.constant 128 : index
    %195 = vector.load %arg3[%c0_70, %c128_71] : memref<8x256xf32, #tpu.memory_space<vmem>>, vector<8x32xf32>
    %cst_72 = arith.constant dense<0.000000e+00> : vector<8x16xf32>
    %196 = tpu.matmul %193, %10, %cst_72 {dimension_numbers = #tpu.dot_dimension_numbers<[1], [0], [0], [1], [0, 0, 1, 1], [], []>} : vector<8x16xf32>, vector<16x16xf32>, vector<8x16xf32> -> vector<8x16xf32>
    %197 = arith.addf %196, %13 : vector<8x16xf32>
    %198 = vector.broadcast %8 : vector<1x16xf32> to vector<8x16xf32>
    %199 = arith.addf %197, %198 : vector<8x16xf32>
    %cst_73 = arith.constant dense<0.000000e+00> : vector<8x16xf32>
    %200 = tpu.matmul %199, %11, %cst_73 {dimension_numbers = #tpu.dot_dimension_numbers<[1], [0], [0], [1], [0, 0, 1, 1], [], []>} : vector<8x16xf32>, vector<16x16xf32>, vector<8x16xf32> -> vector<8x16xf32>
    %cst_74 = arith.constant dense<0xFF800000> : vector<8xf32>
    %201 = vector.multi_reduction <maximumf>, %200, %cst_74 [1] : vector<8x16xf32> to vector<8xf32>
    %202 = vector.shape_cast %201 : vector<8xf32> to vector<8x1xf32>
    %203 = vector.broadcast %202 : vector<8x1xf32> to vector<8x16xf32>
    %204 = arith.subf %200, %203 : vector<8x16xf32>
    %205 = math.exp %204 : vector<8x16xf32>
    %cst_75 = arith.constant dense<0.000000e+00> : vector<8xf32>
    %206 = vector.multi_reduction <add>, %205, %cst_75 [1] : vector<8x16xf32> to vector<8xf32>
    %207 = vector.shape_cast %206 : vector<8xf32> to vector<8x1xf32>
    %208 = vector.broadcast %207 : vector<8x1xf32> to vector<8x16xf32>
    %209 = arith.divf %205, %208 : vector<8x16xf32>
    %210 = arith.mulf %200, %209 : vector<8x16xf32>
    %cst_76 = arith.constant dense<0.000000e+00> : vector<8xf32>
    %211 = vector.multi_reduction <add>, %210, %cst_76 [1] : vector<8x16xf32> to vector<8xf32>
    %212 = vector.shape_cast %211 : vector<8xf32> to vector<8x1xf32>
    %213 = vector.broadcast %4 : vector<1x32xf32> to vector<8x32xf32>
    %214 = arith.mulf %194, %213 : vector<8x32xf32>
    %cst_77 = arith.constant dense<0.000000e+00> : vector<8xf32>
    %215 = vector.multi_reduction <add>, %214, %cst_77 [1] : vector<8x32xf32> to vector<8xf32>
    %216 = vector.shape_cast %215 : vector<8xf32> to vector<8x1xf32>
    %217 = vector.broadcast %5 : vector<1x32xf32> to vector<8x32xf32>
    %218 = arith.mulf %195, %217 : vector<8x32xf32>
    %cst_78 = arith.constant dense<0.000000e+00> : vector<8xf32>
    %219 = vector.multi_reduction <add>, %218, %cst_78 [1] : vector<8x32xf32> to vector<8xf32>
    %220 = vector.shape_cast %219 : vector<8xf32> to vector<8x1xf32>
    %221 = arith.addf %216, %220 : vector<8x1xf32>
    %c4_i32 = arith.constant 4 : i32
    %222 = vector.broadcast %c4_i32 : i32 to vector<1x8xi32>
    %223 = arith.cmpi eq, %18, %222 : vector<1x8xi32>
    %224 = vector.shape_cast %223 : vector<1x8xi1> to vector<1x8xi1>
    %225 = vector.broadcast %224 : vector<1x8xi1> to vector<8x8xi1>
    %226 = vector.shape_cast %212 : vector<8x1xf32> to vector<8x1xf32>
    %227 = vector.broadcast %226 : vector<8x1xf32> to vector<8x8xf32>
    %228 = arith.select %225, %227, %185 : vector<8x8xi1>, vector<8x8xf32>
    %c4_i32_79 = arith.constant 4 : i32
    %229 = vector.broadcast %c4_i32_79 : i32 to vector<1x8xi32>
    %230 = arith.cmpi eq, %18, %229 : vector<1x8xi32>
    %231 = vector.shape_cast %230 : vector<1x8xi1> to vector<1x8xi1>
    %232 = vector.broadcast %231 : vector<1x8xi1> to vector<8x8xi1>
    %233 = vector.shape_cast %221 : vector<8x1xf32> to vector<8x1xf32>
    %234 = vector.broadcast %233 : vector<8x1xf32> to vector<8x8xf32>
    %235 = arith.select %232, %234, %192 : vector<8x8xi1>, vector<8x8xf32>
    %c0_80 = arith.constant 0 : index
    %c80 = arith.constant 80 : index
    %236 = vector.load %arg4[%c0_80, %c80] : memref<8x128xf32, #tpu.memory_space<vmem>>, vector<8x16xf32>
    %c0_81 = arith.constant 0 : index
    %c160 = arith.constant 160 : index
    %237 = vector.load %arg2[%c0_81, %c160] : memref<8x256xf32, #tpu.memory_space<vmem>>, vector<8x32xf32>
    %c0_82 = arith.constant 0 : index
    %c160_83 = arith.constant 160 : index
    %238 = vector.load %arg3[%c0_82, %c160_83] : memref<8x256xf32, #tpu.memory_space<vmem>>, vector<8x32xf32>
    %cst_84 = arith.constant dense<0.000000e+00> : vector<8x16xf32>
    %239 = tpu.matmul %236, %10, %cst_84 {dimension_numbers = #tpu.dot_dimension_numbers<[1], [0], [0], [1], [0, 0, 1, 1], [], []>} : vector<8x16xf32>, vector<16x16xf32>, vector<8x16xf32> -> vector<8x16xf32>
    %240 = arith.addf %239, %13 : vector<8x16xf32>
    %241 = vector.broadcast %8 : vector<1x16xf32> to vector<8x16xf32>
    %242 = arith.addf %240, %241 : vector<8x16xf32>
    %cst_85 = arith.constant dense<0.000000e+00> : vector<8x16xf32>
    %243 = tpu.matmul %242, %11, %cst_85 {dimension_numbers = #tpu.dot_dimension_numbers<[1], [0], [0], [1], [0, 0, 1, 1], [], []>} : vector<8x16xf32>, vector<16x16xf32>, vector<8x16xf32> -> vector<8x16xf32>
    %cst_86 = arith.constant dense<0xFF800000> : vector<8xf32>
    %244 = vector.multi_reduction <maximumf>, %243, %cst_86 [1] : vector<8x16xf32> to vector<8xf32>
    %245 = vector.shape_cast %244 : vector<8xf32> to vector<8x1xf32>
    %246 = vector.broadcast %245 : vector<8x1xf32> to vector<8x16xf32>
    %247 = arith.subf %243, %246 : vector<8x16xf32>
    %248 = math.exp %247 : vector<8x16xf32>
    %cst_87 = arith.constant dense<0.000000e+00> : vector<8xf32>
    %249 = vector.multi_reduction <add>, %248, %cst_87 [1] : vector<8x16xf32> to vector<8xf32>
    %250 = vector.shape_cast %249 : vector<8xf32> to vector<8x1xf32>
    %251 = vector.broadcast %250 : vector<8x1xf32> to vector<8x16xf32>
    %252 = arith.divf %248, %251 : vector<8x16xf32>
    %253 = arith.mulf %243, %252 : vector<8x16xf32>
    %cst_88 = arith.constant dense<0.000000e+00> : vector<8xf32>
    %254 = vector.multi_reduction <add>, %253, %cst_88 [1] : vector<8x16xf32> to vector<8xf32>
    %255 = vector.shape_cast %254 : vector<8xf32> to vector<8x1xf32>
    %256 = vector.broadcast %4 : vector<1x32xf32> to vector<8x32xf32>
    %257 = arith.mulf %237, %256 : vector<8x32xf32>
    %cst_89 = arith.constant dense<0.000000e+00> : vector<8xf32>
    %258 = vector.multi_reduction <add>, %257, %cst_89 [1] : vector<8x32xf32> to vector<8xf32>
    %259 = vector.shape_cast %258 : vector<8xf32> to vector<8x1xf32>
    %260 = vector.broadcast %5 : vector<1x32xf32> to vector<8x32xf32>
    %261 = arith.mulf %238, %260 : vector<8x32xf32>
    %cst_90 = arith.constant dense<0.000000e+00> : vector<8xf32>
    %262 = vector.multi_reduction <add>, %261, %cst_90 [1] : vector<8x32xf32> to vector<8xf32>
    %263 = vector.shape_cast %262 : vector<8xf32> to vector<8x1xf32>
    %264 = arith.addf %259, %263 : vector<8x1xf32>
    %c5_i32 = arith.constant 5 : i32
    %265 = vector.broadcast %c5_i32 : i32 to vector<1x8xi32>
    %266 = arith.cmpi eq, %18, %265 : vector<1x8xi32>
    %267 = vector.shape_cast %266 : vector<1x8xi1> to vector<1x8xi1>
    %268 = vector.broadcast %267 : vector<1x8xi1> to vector<8x8xi1>
    %269 = vector.shape_cast %255 : vector<8x1xf32> to vector<8x1xf32>
    %270 = vector.broadcast %269 : vector<8x1xf32> to vector<8x8xf32>
    %271 = arith.select %268, %270, %228 : vector<8x8xi1>, vector<8x8xf32>
    %c5_i32_91 = arith.constant 5 : i32
    %272 = vector.broadcast %c5_i32_91 : i32 to vector<1x8xi32>
    %273 = arith.cmpi eq, %18, %272 : vector<1x8xi32>
    %274 = vector.shape_cast %273 : vector<1x8xi1> to vector<1x8xi1>
    %275 = vector.broadcast %274 : vector<1x8xi1> to vector<8x8xi1>
    %276 = vector.shape_cast %264 : vector<8x1xf32> to vector<8x1xf32>
    %277 = vector.broadcast %276 : vector<8x1xf32> to vector<8x8xf32>
    %278 = arith.select %275, %277, %235 : vector<8x8xi1>, vector<8x8xf32>
    %c0_92 = arith.constant 0 : index
    %c96_93 = arith.constant 96 : index
    %279 = vector.load %arg4[%c0_92, %c96_93] : memref<8x128xf32, #tpu.memory_space<vmem>>, vector<8x16xf32>
    %c0_94 = arith.constant 0 : index
    %c192 = arith.constant 192 : index
    %280 = vector.load %arg2[%c0_94, %c192] : memref<8x256xf32, #tpu.memory_space<vmem>>, vector<8x32xf32>
    %c0_95 = arith.constant 0 : index
    %c192_96 = arith.constant 192 : index
    %281 = vector.load %arg3[%c0_95, %c192_96] : memref<8x256xf32, #tpu.memory_space<vmem>>, vector<8x32xf32>
    %cst_97 = arith.constant dense<0.000000e+00> : vector<8x16xf32>
    %282 = tpu.matmul %279, %10, %cst_97 {dimension_numbers = #tpu.dot_dimension_numbers<[1], [0], [0], [1], [0, 0, 1, 1], [], []>} : vector<8x16xf32>, vector<16x16xf32>, vector<8x16xf32> -> vector<8x16xf32>
    %283 = arith.addf %282, %13 : vector<8x16xf32>
    %284 = vector.broadcast %8 : vector<1x16xf32> to vector<8x16xf32>
    %285 = arith.addf %283, %284 : vector<8x16xf32>
    %cst_98 = arith.constant dense<0.000000e+00> : vector<8x16xf32>
    %286 = tpu.matmul %285, %11, %cst_98 {dimension_numbers = #tpu.dot_dimension_numbers<[1], [0], [0], [1], [0, 0, 1, 1], [], []>} : vector<8x16xf32>, vector<16x16xf32>, vector<8x16xf32> -> vector<8x16xf32>
    %cst_99 = arith.constant dense<0xFF800000> : vector<8xf32>
    %287 = vector.multi_reduction <maximumf>, %286, %cst_99 [1] : vector<8x16xf32> to vector<8xf32>
    %288 = vector.shape_cast %287 : vector<8xf32> to vector<8x1xf32>
    %289 = vector.broadcast %288 : vector<8x1xf32> to vector<8x16xf32>
    %290 = arith.subf %286, %289 : vector<8x16xf32>
    %291 = math.exp %290 : vector<8x16xf32>
    %cst_100 = arith.constant dense<0.000000e+00> : vector<8xf32>
    %292 = vector.multi_reduction <add>, %291, %cst_100 [1] : vector<8x16xf32> to vector<8xf32>
    %293 = vector.shape_cast %292 : vector<8xf32> to vector<8x1xf32>
    %294 = vector.broadcast %293 : vector<8x1xf32> to vector<8x16xf32>
    %295 = arith.divf %291, %294 : vector<8x16xf32>
    %296 = arith.mulf %286, %295 : vector<8x16xf32>
    %cst_101 = arith.constant dense<0.000000e+00> : vector<8xf32>
    %297 = vector.multi_reduction <add>, %296, %cst_101 [1] : vector<8x16xf32> to vector<8xf32>
    %298 = vector.shape_cast %297 : vector<8xf32> to vector<8x1xf32>
    %299 = vector.broadcast %4 : vector<1x32xf32> to vector<8x32xf32>
    %300 = arith.mulf %280, %299 : vector<8x32xf32>
    %cst_102 = arith.constant dense<0.000000e+00> : vector<8xf32>
    %301 = vector.multi_reduction <add>, %300, %cst_102 [1] : vector<8x32xf32> to vector<8xf32>
    %302 = vector.shape_cast %301 : vector<8xf32> to vector<8x1xf32>
    %303 = vector.broadcast %5 : vector<1x32xf32> to vector<8x32xf32>
    %304 = arith.mulf %281, %303 : vector<8x32xf32>
    %cst_103 = arith.constant dense<0.000000e+00> : vector<8xf32>
    %305 = vector.multi_reduction <add>, %304, %cst_103 [1] : vector<8x32xf32> to vector<8xf32>
    %306 = vector.shape_cast %305 : vector<8xf32> to vector<8x1xf32>
    %307 = arith.addf %302, %306 : vector<8x1xf32>
    %c6_i32 = arith.constant 6 : i32
    %308 = vector.broadcast %c6_i32 : i32 to vector<1x8xi32>
    %309 = arith.cmpi eq, %18, %308 : vector<1x8xi32>
    %310 = vector.shape_cast %309 : vector<1x8xi1> to vector<1x8xi1>
    %311 = vector.broadcast %310 : vector<1x8xi1> to vector<8x8xi1>
    %312 = vector.shape_cast %298 : vector<8x1xf32> to vector<8x1xf32>
    %313 = vector.broadcast %312 : vector<8x1xf32> to vector<8x8xf32>
    %314 = arith.select %311, %313, %271 : vector<8x8xi1>, vector<8x8xf32>
    %c6_i32_104 = arith.constant 6 : i32
    %315 = vector.broadcast %c6_i32_104 : i32 to vector<1x8xi32>
    %316 = arith.cmpi eq, %18, %315 : vector<1x8xi32>
    %317 = vector.shape_cast %316 : vector<1x8xi1> to vector<1x8xi1>
    %318 = vector.broadcast %317 : vector<1x8xi1> to vector<8x8xi1>
    %319 = vector.shape_cast %307 : vector<8x1xf32> to vector<8x1xf32>
    %320 = vector.broadcast %319 : vector<8x1xf32> to vector<8x8xf32>
    %321 = arith.select %318, %320, %278 : vector<8x8xi1>, vector<8x8xf32>
    %c0_105 = arith.constant 0 : index
    %c112 = arith.constant 112 : index
    %322 = vector.load %arg4[%c0_105, %c112] : memref<8x128xf32, #tpu.memory_space<vmem>>, vector<8x16xf32>
    %c0_106 = arith.constant 0 : index
    %c224 = arith.constant 224 : index
    %323 = vector.load %arg2[%c0_106, %c224] : memref<8x256xf32, #tpu.memory_space<vmem>>, vector<8x32xf32>
    %c0_107 = arith.constant 0 : index
    %c224_108 = arith.constant 224 : index
    %324 = vector.load %arg3[%c0_107, %c224_108] : memref<8x256xf32, #tpu.memory_space<vmem>>, vector<8x32xf32>
    %cst_109 = arith.constant dense<0.000000e+00> : vector<8x16xf32>
    %325 = tpu.matmul %322, %10, %cst_109 {dimension_numbers = #tpu.dot_dimension_numbers<[1], [0], [0], [1], [0, 0, 1, 1], [], []>} : vector<8x16xf32>, vector<16x16xf32>, vector<8x16xf32> -> vector<8x16xf32>
    %326 = arith.addf %325, %13 : vector<8x16xf32>
    %327 = vector.broadcast %8 : vector<1x16xf32> to vector<8x16xf32>
    %328 = arith.addf %326, %327 : vector<8x16xf32>
    %cst_110 = arith.constant dense<0.000000e+00> : vector<8x16xf32>
    %329 = tpu.matmul %328, %11, %cst_110 {dimension_numbers = #tpu.dot_dimension_numbers<[1], [0], [0], [1], [0, 0, 1, 1], [], []>} : vector<8x16xf32>, vector<16x16xf32>, vector<8x16xf32> -> vector<8x16xf32>
    %cst_111 = arith.constant dense<0xFF800000> : vector<8xf32>
    %330 = vector.multi_reduction <maximumf>, %329, %cst_111 [1] : vector<8x16xf32> to vector<8xf32>
    %331 = vector.shape_cast %330 : vector<8xf32> to vector<8x1xf32>
    %332 = vector.broadcast %331 : vector<8x1xf32> to vector<8x16xf32>
    %333 = arith.subf %329, %332 : vector<8x16xf32>
    %334 = math.exp %333 : vector<8x16xf32>
    %cst_112 = arith.constant dense<0.000000e+00> : vector<8xf32>
    %335 = vector.multi_reduction <add>, %334, %cst_112 [1] : vector<8x16xf32> to vector<8xf32>
    %336 = vector.shape_cast %335 : vector<8xf32> to vector<8x1xf32>
    %337 = vector.broadcast %336 : vector<8x1xf32> to vector<8x16xf32>
    %338 = arith.divf %334, %337 : vector<8x16xf32>
    %339 = arith.mulf %329, %338 : vector<8x16xf32>
    %cst_113 = arith.constant dense<0.000000e+00> : vector<8xf32>
    %340 = vector.multi_reduction <add>, %339, %cst_113 [1] : vector<8x16xf32> to vector<8xf32>
    %341 = vector.shape_cast %340 : vector<8xf32> to vector<8x1xf32>
    %342 = vector.broadcast %4 : vector<1x32xf32> to vector<8x32xf32>
    %343 = arith.mulf %323, %342 : vector<8x32xf32>
    %cst_114 = arith.constant dense<0.000000e+00> : vector<8xf32>
    %344 = vector.multi_reduction <add>, %343, %cst_114 [1] : vector<8x32xf32> to vector<8xf32>
    %345 = vector.shape_cast %344 : vector<8xf32> to vector<8x1xf32>
    %346 = vector.broadcast %5 : vector<1x32xf32> to vector<8x32xf32>
    %347 = arith.mulf %324, %346 : vector<8x32xf32>
    %cst_115 = arith.constant dense<0.000000e+00> : vector<8xf32>
    %348 = vector.multi_reduction <add>, %347, %cst_115 [1] : vector<8x32xf32> to vector<8xf32>
    %349 = vector.shape_cast %348 : vector<8xf32> to vector<8x1xf32>
    %350 = arith.addf %345, %349 : vector<8x1xf32>
    %c7_i32 = arith.constant 7 : i32
    %351 = vector.broadcast %c7_i32 : i32 to vector<1x8xi32>
    %352 = arith.cmpi eq, %18, %351 : vector<1x8xi32>
    %353 = vector.shape_cast %352 : vector<1x8xi1> to vector<1x8xi1>
    %354 = vector.broadcast %353 : vector<1x8xi1> to vector<8x8xi1>
    %355 = vector.shape_cast %341 : vector<8x1xf32> to vector<8x1xf32>
    %356 = vector.broadcast %355 : vector<8x1xf32> to vector<8x8xf32>
    %357 = arith.select %354, %356, %314 : vector<8x8xi1>, vector<8x8xf32>
    %c7_i32_116 = arith.constant 7 : i32
    %358 = vector.broadcast %c7_i32_116 : i32 to vector<1x8xi32>
    %359 = arith.cmpi eq, %18, %358 : vector<1x8xi32>
    %360 = vector.shape_cast %359 : vector<1x8xi1> to vector<1x8xi1>
    %361 = vector.broadcast %360 : vector<1x8xi1> to vector<8x8xi1>
    %362 = vector.shape_cast %350 : vector<8x1xf32> to vector<8x1xf32>
    %363 = vector.broadcast %362 : vector<8x1xf32> to vector<8x8xf32>
    %364 = arith.select %361, %363, %321 : vector<8x8xi1>, vector<8x8xf32>
    %cst_117 = arith.constant dense<0.000000e+00> : vector<8x8xf32>
    %365 = tpu.matmul %357, %12, %cst_117 {dimension_numbers = #tpu.dot_dimension_numbers<[1], [0], [0], [1], [0, 0, 1, 1], [], []>} : vector<8x8xf32>, vector<8x8xf32>, vector<8x8xf32> -> vector<8x8xf32>
    %366 = vector.broadcast %17 : vector<8x1xf32> to vector<8x8xf32>
    %367 = arith.addf %366, %364 : vector<8x8xf32>
    %368 = arith.addf %367, %365 : vector<8x8xf32>
    %369 = vector.broadcast %6 : vector<1x8xf32> to vector<8x8xf32>
    %370 = arith.addf %368, %369 : vector<8x8xf32>
    %371 = vector.broadcast %7 : vector<1x8xf32> to vector<8x8xf32>
    %372 = arith.mulf %370, %371 : vector<8x8xf32>
    %cst_118 = arith.constant dense<0xFF800000> : vector<8xf32>
    %373 = vector.multi_reduction <maximumf>, %372, %cst_118 [1] : vector<8x8xf32> to vector<8xf32>
    %374 = vector.shape_cast %373 : vector<8xf32> to vector<8x1xf32>
    %375 = vector.broadcast %374 : vector<8x1xf32> to vector<8x8xf32>
    %376 = arith.subf %372, %375 : vector<8x8xf32>
    %377 = math.exp %376 : vector<8x8xf32>
    %cst_119 = arith.constant dense<0.000000e+00> : vector<8xf32>
    %378 = vector.multi_reduction <add>, %377, %cst_119 [1] : vector<8x8xf32> to vector<8xf32>
    %379 = vector.shape_cast %378 : vector<8xf32> to vector<8x1xf32>
    %380 = vector.broadcast %379 : vector<8x1xf32> to vector<8x8xf32>
    %381 = arith.divf %377, %380 : vector<8x8xf32>
    %c0_120 = arith.constant 0 : index
    %c0_121 = arith.constant 0 : index
    %382 = vector.load %arg3[%c0_120, %c0_121] : memref<8x256xf32, #tpu.memory_space<vmem>>, vector<8x32xf32>
    %383 = vector.extract_strided_slice %381 {offsets = [0, 0], sizes = [8, 1], strides = [1, 1]} : vector<8x8xf32> to vector<8x1xf32>
    %384 = vector.broadcast %383 : vector<8x1xf32> to vector<8x32xf32>
    %385 = arith.mulf %384, %382 : vector<8x32xf32>
    %386 = arith.addf %0, %385 : vector<8x32xf32>
    %c0_122 = arith.constant 0 : index
    %c32_123 = arith.constant 32 : index
    %387 = vector.load %arg3[%c0_122, %c32_123] : memref<8x256xf32, #tpu.memory_space<vmem>>, vector<8x32xf32>
    %388 = vector.extract_strided_slice %381 {offsets = [0, 1], sizes = [8, 1], strides = [1, 1]} : vector<8x8xf32> to vector<8x1xf32>
    %389 = vector.broadcast %388 : vector<8x1xf32> to vector<8x32xf32>
    %390 = arith.mulf %389, %387 : vector<8x32xf32>
    %391 = arith.addf %386, %390 : vector<8x32xf32>
    %c0_124 = arith.constant 0 : index
    %c64_125 = arith.constant 64 : index
    %392 = vector.load %arg3[%c0_124, %c64_125] : memref<8x256xf32, #tpu.memory_space<vmem>>, vector<8x32xf32>
    %393 = vector.extract_strided_slice %381 {offsets = [0, 2], sizes = [8, 1], strides = [1, 1]} : vector<8x8xf32> to vector<8x1xf32>
    %394 = vector.broadcast %393 : vector<8x1xf32> to vector<8x32xf32>
    %395 = arith.mulf %394, %392 : vector<8x32xf32>
    %396 = arith.addf %391, %395 : vector<8x32xf32>
    %c0_126 = arith.constant 0 : index
    %c96_127 = arith.constant 96 : index
    %397 = vector.load %arg3[%c0_126, %c96_127] : memref<8x256xf32, #tpu.memory_space<vmem>>, vector<8x32xf32>
    %398 = vector.extract_strided_slice %381 {offsets = [0, 3], sizes = [8, 1], strides = [1, 1]} : vector<8x8xf32> to vector<8x1xf32>
    %399 = vector.broadcast %398 : vector<8x1xf32> to vector<8x32xf32>
    %400 = arith.mulf %399, %397 : vector<8x32xf32>
    %401 = arith.addf %396, %400 : vector<8x32xf32>
    %c0_128 = arith.constant 0 : index
    %c128_129 = arith.constant 128 : index
    %402 = vector.load %arg3[%c0_128, %c128_129] : memref<8x256xf32, #tpu.memory_space<vmem>>, vector<8x32xf32>
    %403 = vector.extract_strided_slice %381 {offsets = [0, 4], sizes = [8, 1], strides = [1, 1]} : vector<8x8xf32> to vector<8x1xf32>
    %404 = vector.broadcast %403 : vector<8x1xf32> to vector<8x32xf32>
    %405 = arith.mulf %404, %402 : vector<8x32xf32>
    %406 = arith.addf %401, %405 : vector<8x32xf32>
    %c0_130 = arith.constant 0 : index
    %c160_131 = arith.constant 160 : index
    %407 = vector.load %arg3[%c0_130, %c160_131] : memref<8x256xf32, #tpu.memory_space<vmem>>, vector<8x32xf32>
    %408 = vector.extract_strided_slice %381 {offsets = [0, 5], sizes = [8, 1], strides = [1, 1]} : vector<8x8xf32> to vector<8x1xf32>
    %409 = vector.broadcast %408 : vector<8x1xf32> to vector<8x32xf32>
    %410 = arith.mulf %409, %407 : vector<8x32xf32>
    %411 = arith.addf %406, %410 : vector<8x32xf32>
    %c0_132 = arith.constant 0 : index
    %c192_133 = arith.constant 192 : index
    %412 = vector.load %arg3[%c0_132, %c192_133] : memref<8x256xf32, #tpu.memory_space<vmem>>, vector<8x32xf32>
    %413 = vector.extract_strided_slice %381 {offsets = [0, 6], sizes = [8, 1], strides = [1, 1]} : vector<8x8xf32> to vector<8x1xf32>
    %414 = vector.broadcast %413 : vector<8x1xf32> to vector<8x32xf32>
    %415 = arith.mulf %414, %412 : vector<8x32xf32>
    %416 = arith.addf %411, %415 : vector<8x32xf32>
    %c0_134 = arith.constant 0 : index
    %c224_135 = arith.constant 224 : index
    %417 = vector.load %arg3[%c0_134, %c224_135] : memref<8x256xf32, #tpu.memory_space<vmem>>, vector<8x32xf32>
    %418 = vector.extract_strided_slice %381 {offsets = [0, 7], sizes = [8, 1], strides = [1, 1]} : vector<8x8xf32> to vector<8x1xf32>
    %419 = vector.broadcast %418 : vector<8x1xf32> to vector<8x32xf32>
    %420 = arith.mulf %419, %417 : vector<8x32xf32>
    %421 = arith.addf %416, %420 : vector<8x32xf32>
    %cst_136 = arith.constant 0.000000e+00 : f32
    %422 = vector.broadcast %cst_136 : f32 to vector<8x1xf32>
    %c0_137 = arith.constant 0 : index
    %c0_138 = arith.constant 0 : index
    %423 = vector.load %arg2[%c0_137, %c0_138] : memref<8x256xf32, #tpu.memory_space<vmem>>, vector<8x32xf32>
    %c0_139 = arith.constant 0 : index
    %c128_140 = arith.constant 128 : index
    %424 = vector.load %arg2[%c0_139, %c128_140] : memref<8x256xf32, #tpu.memory_space<vmem>>, vector<8x32xf32>
    %425 = arith.mulf %421, %423 : vector<8x32xf32>
    %cst_141 = arith.constant dense<0.000000e+00> : vector<8xf32>
    %426 = vector.multi_reduction <add>, %425, %cst_141 [1] : vector<8x32xf32> to vector<8xf32>
    %427 = vector.shape_cast %426 : vector<8xf32> to vector<8x1xf32>
    %428 = arith.mulf %421, %424 : vector<8x32xf32>
    %cst_142 = arith.constant dense<0.000000e+00> : vector<8xf32>
    %429 = vector.multi_reduction <add>, %428, %cst_142 [1] : vector<8x32xf32> to vector<8xf32>
    %430 = vector.shape_cast %429 : vector<8xf32> to vector<8x1xf32>
    %431 = vector.extract_strided_slice %1 {offsets = [0, 0], sizes = [8, 1], strides = [1, 1]} : vector<8x8xf32> to vector<8x1xf32>
    %432 = arith.mulf %427, %431 : vector<8x1xf32>
    %433 = vector.extract_strided_slice %1 {offsets = [0, 4], sizes = [8, 1], strides = [1, 1]} : vector<8x8xf32> to vector<8x1xf32>
    %434 = arith.mulf %430, %433 : vector<8x1xf32>
    %435 = arith.subf %432, %434 : vector<8x1xf32>
    %cst_143 = arith.constant 0.000000e+00 : f32
    %436 = vector.broadcast %cst_143 : f32 to vector<8x1xf32>
    %437 = arith.cmpf oge, %435, %436 : vector<8x1xf32>
    %cst_144 = arith.constant 0.000000e+00 : f32
    %438 = vector.broadcast %cst_144 : f32 to vector<8x1xf32>
    %439 = arith.subf %438, %435 : vector<8x1xf32>
    %440 = math.exp %439 : vector<8x1xf32>
    %441 = math.log1p %440 : vector<8x1xf32>
    %cst_145 = arith.constant 0.000000e+00 : f32
    %442 = vector.broadcast %cst_145 : f32 to vector<8x1xf32>
    %443 = arith.subf %442, %441 : vector<8x1xf32>
    %444 = math.exp %435 : vector<8x1xf32>
    %445 = math.log1p %444 : vector<8x1xf32>
    %446 = arith.subf %435, %445 : vector<8x1xf32>
    %447 = arith.select %437, %443, %446 : vector<8x1xi1>, vector<8x1xf32>
    %448 = arith.addf %422, %447 : vector<8x1xf32>
    %c0_146 = arith.constant 0 : index
    %c32_147 = arith.constant 32 : index
    %449 = vector.load %arg2[%c0_146, %c32_147] : memref<8x256xf32, #tpu.memory_space<vmem>>, vector<8x32xf32>
    %c0_148 = arith.constant 0 : index
    %c160_149 = arith.constant 160 : index
    %450 = vector.load %arg2[%c0_148, %c160_149] : memref<8x256xf32, #tpu.memory_space<vmem>>, vector<8x32xf32>
    %451 = arith.mulf %421, %449 : vector<8x32xf32>
    %cst_150 = arith.constant dense<0.000000e+00> : vector<8xf32>
    %452 = vector.multi_reduction <add>, %451, %cst_150 [1] : vector<8x32xf32> to vector<8xf32>
    %453 = vector.shape_cast %452 : vector<8xf32> to vector<8x1xf32>
    %454 = arith.mulf %421, %450 : vector<8x32xf32>
    %cst_151 = arith.constant dense<0.000000e+00> : vector<8xf32>
    %455 = vector.multi_reduction <add>, %454, %cst_151 [1] : vector<8x32xf32> to vector<8xf32>
    %456 = vector.shape_cast %455 : vector<8xf32> to vector<8x1xf32>
    %457 = vector.extract_strided_slice %1 {offsets = [0, 1], sizes = [8, 1], strides = [1, 1]} : vector<8x8xf32> to vector<8x1xf32>
    %458 = arith.mulf %453, %457 : vector<8x1xf32>
    %459 = vector.extract_strided_slice %1 {offsets = [0, 5], sizes = [8, 1], strides = [1, 1]} : vector<8x8xf32> to vector<8x1xf32>
    %460 = arith.mulf %456, %459 : vector<8x1xf32>
    %461 = arith.subf %458, %460 : vector<8x1xf32>
    %cst_152 = arith.constant 0.000000e+00 : f32
    %462 = vector.broadcast %cst_152 : f32 to vector<8x1xf32>
    %463 = arith.cmpf oge, %461, %462 : vector<8x1xf32>
    %cst_153 = arith.constant 0.000000e+00 : f32
    %464 = vector.broadcast %cst_153 : f32 to vector<8x1xf32>
    %465 = arith.subf %464, %461 : vector<8x1xf32>
    %466 = math.exp %465 : vector<8x1xf32>
    %467 = math.log1p %466 : vector<8x1xf32>
    %cst_154 = arith.constant 0.000000e+00 : f32
    %468 = vector.broadcast %cst_154 : f32 to vector<8x1xf32>
    %469 = arith.subf %468, %467 : vector<8x1xf32>
    %470 = math.exp %461 : vector<8x1xf32>
    %471 = math.log1p %470 : vector<8x1xf32>
    %472 = arith.subf %461, %471 : vector<8x1xf32>
    %473 = arith.select %463, %469, %472 : vector<8x1xi1>, vector<8x1xf32>
    %474 = arith.addf %448, %473 : vector<8x1xf32>
    %c0_155 = arith.constant 0 : index
    %c64_156 = arith.constant 64 : index
    %475 = vector.load %arg2[%c0_155, %c64_156] : memref<8x256xf32, #tpu.memory_space<vmem>>, vector<8x32xf32>
    %c0_157 = arith.constant 0 : index
    %c192_158 = arith.constant 192 : index
    %476 = vector.load %arg2[%c0_157, %c192_158] : memref<8x256xf32, #tpu.memory_space<vmem>>, vector<8x32xf32>
    %477 = arith.mulf %421, %475 : vector<8x32xf32>
    %cst_159 = arith.constant dense<0.000000e+00> : vector<8xf32>
    %478 = vector.multi_reduction <add>, %477, %cst_159 [1] : vector<8x32xf32> to vector<8xf32>
    %479 = vector.shape_cast %478 : vector<8xf32> to vector<8x1xf32>
    %480 = arith.mulf %421, %476 : vector<8x32xf32>
    %cst_160 = arith.constant dense<0.000000e+00> : vector<8xf32>
    %481 = vector.multi_reduction <add>, %480, %cst_160 [1] : vector<8x32xf32> to vector<8xf32>
    %482 = vector.shape_cast %481 : vector<8xf32> to vector<8x1xf32>
    %483 = vector.extract_strided_slice %1 {offsets = [0, 2], sizes = [8, 1], strides = [1, 1]} : vector<8x8xf32> to vector<8x1xf32>
    %484 = arith.mulf %479, %483 : vector<8x1xf32>
    %485 = vector.extract_strided_slice %1 {offsets = [0, 6], sizes = [8, 1], strides = [1, 1]} : vector<8x8xf32> to vector<8x1xf32>
    %486 = arith.mulf %482, %485 : vector<8x1xf32>
    %487 = arith.subf %484, %486 : vector<8x1xf32>
    %cst_161 = arith.constant 0.000000e+00 : f32
    %488 = vector.broadcast %cst_161 : f32 to vector<8x1xf32>
    %489 = arith.cmpf oge, %487, %488 : vector<8x1xf32>
    %cst_162 = arith.constant 0.000000e+00 : f32
    %490 = vector.broadcast %cst_162 : f32 to vector<8x1xf32>
    %491 = arith.subf %490, %487 : vector<8x1xf32>
    %492 = math.exp %491 : vector<8x1xf32>
    %493 = math.log1p %492 : vector<8x1xf32>
    %cst_163 = arith.constant 0.000000e+00 : f32
    %494 = vector.broadcast %cst_163 : f32 to vector<8x1xf32>
    %495 = arith.subf %494, %493 : vector<8x1xf32>
    %496 = math.exp %487 : vector<8x1xf32>
    %497 = math.log1p %496 : vector<8x1xf32>
    %498 = arith.subf %487, %497 : vector<8x1xf32>
    %499 = arith.select %489, %495, %498 : vector<8x1xi1>, vector<8x1xf32>
    %500 = arith.addf %474, %499 : vector<8x1xf32>
    %c0_164 = arith.constant 0 : index
    %c96_165 = arith.constant 96 : index
    %501 = vector.load %arg2[%c0_164, %c96_165] : memref<8x256xf32, #tpu.memory_space<vmem>>, vector<8x32xf32>
    %c0_166 = arith.constant 0 : index
    %c224_167 = arith.constant 224 : index
    %502 = vector.load %arg2[%c0_166, %c224_167] : memref<8x256xf32, #tpu.memory_space<vmem>>, vector<8x32xf32>
    %503 = arith.mulf %421, %501 : vector<8x32xf32>
    %cst_168 = arith.constant dense<0.000000e+00> : vector<8xf32>
    %504 = vector.multi_reduction <add>, %503, %cst_168 [1] : vector<8x32xf32> to vector<8xf32>
    %505 = vector.shape_cast %504 : vector<8xf32> to vector<8x1xf32>
    %506 = arith.mulf %421, %502 : vector<8x32xf32>
    %cst_169 = arith.constant dense<0.000000e+00> : vector<8xf32>
    %507 = vector.multi_reduction <add>, %506, %cst_169 [1] : vector<8x32xf32> to vector<8xf32>
    %508 = vector.shape_cast %507 : vector<8xf32> to vector<8x1xf32>
    %509 = vector.extract_strided_slice %1 {offsets = [0, 3], sizes = [8, 1], strides = [1, 1]} : vector<8x8xf32> to vector<8x1xf32>
    %510 = arith.mulf %505, %509 : vector<8x1xf32>
    %511 = vector.extract_strided_slice %1 {offsets = [0, 7], sizes = [8, 1], strides = [1, 1]} : vector<8x8xf32> to vector<8x1xf32>
    %512 = arith.mulf %508, %511 : vector<8x1xf32>
    %513 = arith.subf %510, %512 : vector<8x1xf32>
    %cst_170 = arith.constant 0.000000e+00 : f32
    %514 = vector.broadcast %cst_170 : f32 to vector<8x1xf32>
    %515 = arith.cmpf oge, %513, %514 : vector<8x1xf32>
    %cst_171 = arith.constant 0.000000e+00 : f32
    %516 = vector.broadcast %cst_171 : f32 to vector<8x1xf32>
    %517 = arith.subf %516, %513 : vector<8x1xf32>
    %518 = math.exp %517 : vector<8x1xf32>
    %519 = math.log1p %518 : vector<8x1xf32>
    %cst_172 = arith.constant 0.000000e+00 : f32
    %520 = vector.broadcast %cst_172 : f32 to vector<8x1xf32>
    %521 = arith.subf %520, %519 : vector<8x1xf32>
    %522 = math.exp %513 : vector<8x1xf32>
    %523 = math.log1p %522 : vector<8x1xf32>
    %524 = arith.subf %513, %523 : vector<8x1xf32>
    %525 = arith.select %515, %521, %524 : vector<8x1xi1>, vector<8x1xf32>
    %526 = arith.addf %500, %525 : vector<8x1xf32>
    %c8_i32 = arith.constant 8 : i32
    %527 = arith.muli %arg0, %c8_i32 : i32
    %528 = tpu.iota {dimensions = array<i32: 0>} : vector<8x1xi32>
    %529 = vector.broadcast %527 : i32 to vector<8x1xi32>
    %530 = arith.addi %529, %528 : vector<8x1xi32>
    %c4_i32_173 = arith.constant 4 : i32
    %531 = vector.broadcast %c4_i32_173 : i32 to vector<8x1xi32>
    %532 = arith.cmpi slt, %530, %531 : vector<8x1xi32>
    %533 = arith.extui %532 : vector<8x1xi1> to vector<8x1xi32>
    %534 = arith.sitofp %533 : vector<8x1xi32> to vector<8x1xf32>
    %535 = arith.mulf %526, %534 : vector<8x1xf32>
    %cst_174 = arith.constant 0.000000e+00 : f32
    %536 = vector.broadcast %cst_174 : f32 to vector<8x1xf32>
    %537 = arith.subf %536, %535 : vector<8x1xf32>
    %c0_175 = arith.constant 0 : index
    %c0_176 = arith.constant 0 : index
    %538 = vector.load %arg11[%c0_175, %c0_176] : memref<8x1xf32, #tpu.memory_space<vmem>>, vector<8x1xf32>
    tpu.vector_store %arg11[%c0_175, %c0_176], %537 {strides = array<i32>} : memref<8x1xf32, #tpu.memory_space<vmem>>, vector<8x1xf32>,
    return
  }
  func.func @transform_0(%arg0: i32) -> (i32, i32) {
    %c0_i32 = arith.constant 0 : i32
    %c0_i32_0 = arith.constant 0 : i32
    return %arg0, %c0_i32 : i32, i32
  }
  func.func @transform_1(%arg0: i32) -> (i32, i32) {
    %c0_i32 = arith.constant 0 : i32
    %c0_i32_0 = arith.constant 0 : i32
    return %arg0, %c0_i32 : i32, i32
  }
  func.func @transform_2(%arg0: i32) -> (i32, i32) {
    %c0_i32 = arith.constant 0 : i32
    %c0_i32_0 = arith.constant 0 : i32
    return %arg0, %c0_i32 : i32, i32
  }
  func.func @transform_3(%arg0: i32) -> (i32, i32) {
    %c0_i32 = arith.constant 0 : i32
    %c0_i32_0 = arith.constant 0 : i32
    return %arg0, %c0_i32 : i32, i32
  }
  func.func @transform_4(%arg0: i32) -> (i32, i32) {
    %c0_i32 = arith.constant 0 : i32
    %c0_i32_0 = arith.constant 0 : i32
    return %arg0, %c0_i32 : i32, i32
  }
  func.func @transform_5(%arg0: i32) -> (i32, i32) {
    %c0_i32 = arith.constant 0 : i32
    %c0_i32_0 = arith.constant 0 : i32
    %c0_i32_1 = arith.constant 0 : i32
    return %c0_i32, %c0_i32_0 : i32, i32
  }
  func.func @transform_6(%arg0: i32) -> (i32, i32) {
    %c0_i32 = arith.constant 0 : i32
    %c0_i32_0 = arith.constant 0 : i32
    %c0_i32_1 = arith.constant 0 : i32
    return %c0_i32, %c0_i32_0 : i32, i32
  }
  func.func @transform_7(%arg0: i32) -> (i32, i32) {
    %c0_i32 = arith.constant 0 : i32
    %c0_i32_0 = arith.constant 0 : i32
    %c0_i32_1 = arith.constant 0 : i32
    return %c0_i32, %c0_i32_0 : i32, i32
  }
  func.func @transform_8(%arg0: i32) -> (i32, i32) {
    %c0_i32 = arith.constant 0 : i32
    %c0_i32_0 = arith.constant 0 : i32
    %c0_i32_1 = arith.constant 0 : i32
    return %c0_i32, %c0_i32_0 : i32, i32
  }
  func.func @transform_9(%arg0: i32) -> (i32, i32) {
    %c0_i32 = arith.constant 0 : i32
    %c0_i32_0 = arith.constant 0 : i32
    %c0_i32_1 = arith.constant 0 : i32
    return %c0_i32, %c0_i32_0 : i32, i32
  }
  func.func @transform_10(%arg0: i32) -> (i32, i32) {
    %c0_i32 = arith.constant 0 : i32
    %c0_i32_0 = arith.constant 0 : i32
    return %arg0, %c0_i32 : i32, i32
  }
}

</mosaic_0001>

<llo_original>
// kernel: acf_forward.1
$region0: #{acf_forward.1}
  #allocation0 [shape = 'u32[]', space=smem, size = 0x4, offset = 0x4, fixed_abs, tag = 'smem constant byte address 0x4 - core index']
  #allocation1 [shape = 'u32[144,128]{1,0:T(1,128)}', space=vmem, size = 0x12000, scoped, tag = 'internal scratch']
  %s0 = inlined_call_operand.vmem [shape: f32[8,32], index: 0, kind: input, shape index: {}]
  %s1 = inlined_call_operand.vmem [shape: f32[8,256], index: 1, kind: input, shape index: {}]
  %s2 = inlined_call_operand.vmem [shape: f32[8,256], index: 2, kind: input, shape index: {}]
  %s3 = inlined_call_operand.vmem [shape: f32[8,128], index: 3, kind: input, shape index: {}]
  %s4 = inlined_call_operand.vmem [shape: f32[8,8], index: 4, kind: input, shape index: {}]
  %s5 = inlined_call_operand.vmem [shape: f32[32,16], index: 5, kind: input, shape index: {}]
  %s6 = inlined_call_operand.vmem [shape: f32[16,16], index: 6, kind: input, shape index: {}]
  %s7 = inlined_call_operand.vmem [shape: f32[16,16], index: 7, kind: input, shape index: {}]
  %s8 = inlined_call_operand.vmem [shape: f32[8,8], index: 8, kind: input, shape index: {}]
  %s9 = inlined_call_operand.vmem [shape: f32[8,128], index: 9, kind: input, shape index: {}]
  %s10 = inlined_call_operand.vmem [shape: f32[8,1], index: 10, kind: output, shape index: {}]
  %s11 = sld [smem:[#allocation0]]
  $region50: #{acf_forward.1} parent=0
    _
  %s13 = ssub.s32 1, %s11
  %s14 = scalar_select 0, %s13, %s11
  // Predicated region
  $region2: #{acf_forward.1} parent=0 // pred_check
    _
  $region3: #{acf_forward.1} parent=0 // pred_check_branch
    %16 = sbr.rel (0) target = $region5
  $region4: #{acf_forward.1} parent=0 // pred_region
    _
  $region5: #{acf_forward.1} parent=0 // pred_fallthru
    _
  // Predicated region
  $region6: #{acf_forward.1} parent=0 // pred_check
    _
  $region7: #{acf_forward.1} parent=0 // pred_check_branch
    %18 = sbr.rel (0) target = $region9
  $region8: #{acf_forward.1} parent=0 // pred_region
    _
  $region9: #{acf_forward.1} parent=0 // pred_fallthru
    _
  // Predicated region
  $region10: #{acf_forward.1} parent=0 // pred_check
    _
  $region11: #{acf_forward.1} parent=0 // pred_check_branch
    %20 = sbr.rel (0) target = $region13
  $region12: #{acf_forward.1} parent=0 // pred_region
    _
  $region13: #{acf_forward.1} parent=0 // pred_fallthru
    _
  // Predicated region
  $region14: #{acf_forward.1} parent=0 // pred_check
    _
  $region15: #{acf_forward.1} parent=0 // pred_check_branch
    %22 = sbr.rel (0) target = $region17
  $region16: #{acf_forward.1} parent=0 // pred_region
    _
  $region17: #{acf_forward.1} parent=0 // pred_fallthru
    _
  // Predicated region
  $region18: #{acf_forward.1} parent=0 // pred_check
    _
  $region19: #{acf_forward.1} parent=0 // pred_check_branch
    %24 = sbr.rel (0) target = $region21
  $region20: #{acf_forward.1} parent=0 // pred_region
    _
  $region21: #{acf_forward.1} parent=0 // pred_fallthru
    _
  // Predicated region
  $region22: #{acf_forward.1} parent=0 // pred_check
    _
  $region23: #{acf_forward.1} parent=0 // pred_check_branch
    %26 = sbr.rel (0) target = $region25
  $region24: #{acf_forward.1} parent=0 // pred_region
    _
  $region25: #{acf_forward.1} parent=0 // pred_fallthru
    _
  // Predicated region
  $region26: #{acf_forward.1} parent=0 // pred_check
    _
  $region27: #{acf_forward.1} parent=0 // pred_check_branch
    %28 = sbr.rel (0) target = $region29
  $region28: #{acf_forward.1} parent=0 // pred_region
    _
  $region29: #{acf_forward.1} parent=0 // pred_fallthru
    _
  // Predicated region
  $region30: #{acf_forward.1} parent=0 // pred_check
    _
  $region31: #{acf_forward.1} parent=0 // pred_check_branch
    %30 = sbr.rel (0) target = $region33
  $region32: #{acf_forward.1} parent=0 // pred_region
    _
  $region33: #{acf_forward.1} parent=0 // pred_fallthru
    _
  // Predicated region
  $region34: #{acf_forward.1} parent=0 // pred_check
    _
  $region35: #{acf_forward.1} parent=0 // pred_check_branch
    %32 = sbr.rel (0) target = $region37
  $region36: #{acf_forward.1} parent=0 // pred_region
    _
  $region37: #{acf_forward.1} parent=0 // pred_fallthru
    _
  // Predicated region
  $region38: #{acf_forward.1} parent=0 // pred_check
    _
  $region39: #{acf_forward.1} parent=0 // pred_check_branch
    %34 = sbr.rel (0) target = $region41
  $region40: #{acf_forward.1} parent=0 // pred_region
    _
  $region41: #{acf_forward.1} parent=0 // pred_fallthru
    _
  %v35 = vld [vmem:[%s0] sm:$0xff]
  %v36 = vld [vmem:[%s4] sm:$0xff]
  %v37 = vld [vmem:[%s9] sm:$0xff]
  %v38 = vld [vmem:[%s5] sm:$0xff]
  %v39 = vld [vmem:[%s5 + $0x8] sm:$0xff]
  %v40 = vld [vmem:[%s5 + $0x10] sm:$0xff]
  %v41 = vld [vmem:[%s5 + $0x18] sm:$0xff]
  %v42 = vld [vmem:[%s6] sm:$0xff]
  %v43 = vld [vmem:[%s6 + $0x8] sm:$0xff]
  %v44 = vld [vmem:[%s7] sm:$0xff]
  %v45 = vld [vmem:[%s7 + $0x8] sm:$0xff]
  %v46 = vld [vmem:[%s8] sm:$0xff]
  %vm47 = vcmask 261120
  %v49 = vsel %vm47, %v35, 0
  %51 = vmatprep.subr.mxu0 0.0
  %52 = vmatpush1.msra.mxu0 %v38
  %53 = vmatprep.subr.mxu0 0.0
  %54 = vmatpush1.msra.mxu0 %v39
  %55 = vmatprep.subr.mxu0 0.0
  %56 = vmatpush1.msra.mxu0 %v40
  %57 = vmatprep.subr.mxu0 0.0
  %58 = vmatpush1.msra.mxu0 %v41
  %59 = vmatprep.subr.mxu0 0.0
  %60 = vmatpush1.msra.mxu0 0.0
  %61 = vmatprep.subr.mxu0 0.0
  %62 = vmatpush1.msra.mxu0 0.0
  %63 = vmatprep.subr.mxu0 0.0
  %64 = vmatpush1.msra.mxu0 0.0
  %65 = vmatprep.subr.mxu0 0.0
  %66 = vmatpush1.msra.mxu0 0.0
  %67 = vmatprep.subr.mxu0 0.0
  %68 = vmatpush1.msra.mxu0 0.0
  %69 = vmatprep.subr.mxu0 0.0
  %70 = vmatpush1.msra.mxu0 0.0
  %71 = vmatprep.subr.mxu0 0.0
  %72 = vmatpush1.msra.mxu0 0.0
  %73 = vmatprep.subr.mxu0 0.0
  %74 = vmatpush1.msra.mxu0 0.0
  %75 = vmatprep.subr.mxu0 0.0
  %76 = vmatpush1.msra.mxu0 0.0
  %77 = vmatprep.subr.mxu0 0.0
  %78 = vmatpush1.msra.mxu0 0.0
  %79 = vmatprep.subr.mxu0 0.0
  %80 = vmatpush1.msra.mxu0 0.0
  %81 = vmatprep.subr.mxu0 0.0
  %82 = vmatpush1.msra.mxu0 0.0
  %83 = vmatprep.subr.mxu0 0.0
  %84 = vmatpush1.msra.mxu0 0.0
  %85 = vmatprep.subr.mxu0 0.0
  %86 = vmatpush1.msra.mxu0 0.0
  %87 = vmatprep.subr.mxu0 0.0
  %88 = vmatpush1.msra.mxu0 0.0
  %89 = vmatprep.subr.mxu0 0.0
  %90 = vmatpush1.msra.mxu0 0.0
  %91 = vmatprep.subr.mxu0 0.0
  %92 = vmatpush1.msra.mxu0 0.0
  %93 = vmatprep.subr.mxu0 0.0
  %94 = vmatpush1.msra.mxu0 0.0
  %95 = vmatprep.subr.mxu0 0.0
  %96 = vmatpush1.msra.mxu0 0.0
  %97 = vmatprep.subr.mxu0 0.0
  %98 = vmatpush1.msra.mxu0 0.0
  %99 = vmatprep.subr.mxu0 0.0
  %100 = vmatpush1.msra.mxu0 0.0
  %101 = vmatprep.subr.mxu0 0.0
  %102 = vmatpush1.msra.mxu0 0.0
  %103 = vmatprep.subr.mxu0 0.0
  %104 = vmatpush1.msra.mxu0 0.0
  %105 = vmatprep.subr.mxu0 0.0
  %106 = vmatpush1.msra.mxu0 0.0
  %107 = vmatprep.subr.mxu0 0.0
  %108 = vmatpush1.msra.mxu0 0.0
  %109 = vmatprep.subr.mxu0 0.0
  %110 = vmatpush1.msra.mxu0 0.0
  %111 = vmatprep.subr.mxu0 0.0
  %112 = vmatpush1.msra.mxu0 0.0
  %113 = vmatprep.subr.mxu0 0.0
  %114 = vmatpush1.msra.mxu0 0.0
  %115 = vmatprep.mubr.f32.mxu0 0.0
  %116 = vmatmul.mubr.f32.gmra.mrb[0].mxu0 %v49
  %v117 = vpop.f32.mrb[0].mxu0
  %v118 = vadd.f32 0.0, %v117
  %v119 = vpop.f32.mrb[0].mxu0
  %120 = vdwg.mxu0
  %v121 = vlaneseq
  %v122 = vshrl.u32 %v121, 7
  %v123 = vsub.s32 0, %v122
  %v124 = vrot.slane %v37, %v123
  %v125 = vmul.f32 %v35, %v124
  %v126 = vsel %vm47, %v125, 0.0
  %127 = vadd.xlane.f32.xlu0 %v126
  %v128 = vpop.xlane.xlu0 %127
  %v129 = vlaneseq
  %v130 = vand.u32 %v129, 127
  %v131 = vld [vmem:[%s3] sm:$0xff]
  %v132 = vld [vmem:[%s1] sm:$0xff]
  %v133 = vld [vmem:[%s2] sm:$0xff]
  %vm134 = vcmask 130048
  %v136 = vsel %vm134, %v131, 0
  %138 = vmatprep.subr.mxu0 0.0
  %139 = vmatpush1.msra.mxu0 %v42
  %140 = vmatprep.subr.mxu0 0.0
  %141 = vmatpush1.msra.mxu0 %v43
  %142 = vmatprep.subr.mxu0 0.0
  %143 = vmatpush1.msra.mxu0 0.0
  %144 = vmatprep.subr.mxu0 0.0
  %145 = vmatpush1.msra.mxu0 0.0
  %146 = vmatprep.subr.mxu0 0.0
  %147 = vmatpush1.msra.mxu0 0.0
  %148 = vmatprep.subr.mxu0 0.0
  %149 = vmatpush1.msra.mxu0 0.0
  %150 = vmatprep.subr.mxu0 0.0
  %151 = vmatpush1.msra.mxu0 0.0
  %152 = vmatprep.subr.mxu0 0.0
  %153 = vmatpush1.msra.mxu0 0.0
  %154 = vmatprep.subr.mxu0 0.0
  %155 = vmatpush1.msra.mxu0 0.0
  %156 = vmatprep.subr.mxu0 0.0
  %157 = vmatpush1.msra.mxu0 0.0
  %158 = vmatprep.subr.mxu0 0.0
  %159 = vmatpush1.msra.mxu0 0.0
  %160 = vmatprep.subr.mxu0 0.0
  %161 = vmatpush1.msra.mxu0 0.0
  %162 = vmatprep.subr.mxu0 0.0
  %163 = vmatpush1.msra.mxu0 0.0
  %164 = vmatprep.subr.mxu0 0.0
  %165 = vmatpush1.msra.mxu0 0.0
  %166 = vmatprep.subr.mxu0 0.0
  %167 = vmatpush1.msra.mxu0 0.0
  %168 = vmatprep.subr.mxu0 0.0
  %169 = vmatpush1.msra.mxu0 0.0
  %170 = vmatprep.subr.mxu0 0.0
  %171 = vmatpush1.msra.mxu0 0.0
  %172 = vmatprep.subr.mxu0 0.0
  %173 = vmatpush1.msra.mxu0 0.0
  %174 = vmatprep.subr.mxu0 0.0
  %175 = vmatpush1.msra.mxu0 0.0
  %176 = vmatprep.subr.mxu0 0.0
  %177 = vmatpush1.msra.mxu0 0.0
  %178 = vmatprep.subr.mxu0 0.0
  %179 = vmatpush1.msra.mxu0 0.0
  %180 = vmatprep.subr.mxu0 0.0
  %181 = vmatpush1.msra.mxu0 0.0
  %182 = vmatprep.subr.mxu0 0.0
  %183 = vmatpush1.msra.mxu0 0.0
  %184 = vmatprep.subr.mxu0 0.0
  %185 = vmatpush1.msra.mxu0 0.0
  %186 = vmatprep.subr.mxu0 0.0
  %187 = vmatpush1.msra.mxu0 0.0
  %188 = vmatprep.subr.mxu0 0.0
  %189 = vmatpush1.msra.mxu0 0.0
  %190 = vmatprep.subr.mxu0 0.0
  %191 = vmatpush1.msra.mxu0 0.0
  %192 = vmatprep.subr.mxu0 0.0
  %193 = vmatpush1.msra.mxu0 0.0
  %194 = vmatprep.subr.mxu0 0.0
  %195 = vmatpush1.msra.mxu0 0.0
  %196 = vmatprep.subr.mxu0 0.0
  %197 = vmatpush1.msra.mxu0 0.0
  %198 = vmatprep.subr.mxu0 0.0
  %199 = vmatpush1.msra.mxu0 0.0
  %200 = vmatprep.subr.mxu0 0.0
  %201 = vmatpush1.msra.mxu0 0.0
  %202 = vmatprep.mubr.f32.mxu0 0.0
  %203 = vmatmul.mubr.f32.gmra.mrb[0].mxu0 %v136
  %v204 = vpop.f32.mrb[0].mxu0
  %v205 = vadd.f32 %v118, %v204
  %v206 = vpop.f32.mrb[0].mxu0
  %207 = vdwg.mxu0
  %v208 = vlaneseq
  %v209 = vshrl.u32 %v208, 7
  %v210 = vsub.s32 5, %v209
  %v211 = vrot.slane %v37, %v210
  %v212 = vadd.f32 %v205, %v211
  %v214 = vsel %vm134, %v212, 0
  %216 = vmatprep.subr.mxu0 0.0
  %217 = vmatpush1.msra.mxu0 %v44
  %218 = vmatprep.subr.mxu0 0.0
  %219 = vmatpush1.msra.mxu0 %v45
  %220 = vmatprep.subr.mxu0 0.0
  %221 = vmatpush1.msra.mxu0 0.0
  %222 = vmatprep.subr.mxu0 0.0
  %223 = vmatpush1.msra.mxu0 0.0
  %224 = vmatprep.subr.mxu0 0.0
  %225 = vmatpush1.msra.mxu0 0.0
  %226 = vmatprep.subr.mxu0 0.0
  %227 = vmatpush1.msra.mxu0 0.0
  %228 = vmatprep.subr.mxu0 0.0
  %229 = vmatpush1.msra.mxu0 0.0
  %230 = vmatprep.subr.mxu0 0.0
  %231 = vmatpush1.msra.mxu0 0.0
  %232 = vmatprep.subr.mxu0 0.0
  %233 = vmatpush1.msra.mxu0 0.0
  %234 = vmatprep.subr.mxu0 0.0
  %235 = vmatpush1.msra.mxu0 0.0
  %236 = vmatprep.subr.mxu0 0.0
  %237 = vmatpush1.msra.mxu0 0.0
  %238 = vmatprep.subr.mxu0 0.0
  %239 = vmatpush1.msra.mxu0 0.0
  %240 = vmatprep.subr.mxu0 0.0
  %241 = vmatpush1.msra.mxu0 0.0
  %242 = vmatprep.subr.mxu0 0.0
  %243 = vmatpush1.msra.mxu0 0.0
  %244 = vmatprep.subr.mxu0 0.0
  %245 = vmatpush1.msra.mxu0 0.0
  %246 = vmatprep.subr.mxu0 0.0
  %247 = vmatpush1.msra.mxu0 0.0
  %248 = vmatprep.subr.mxu0 0.0
  %249 = vmatpush1.msra.mxu0 0.0
  %250 = vmatprep.subr.mxu0 0.0
  %251 = vmatpush1.msra.mxu0 0.0
  %252 = vmatprep.subr.mxu0 0.0
  %253 = vmatpush1.msra.mxu0 0.0
  %254 = vmatprep.subr.mxu0 0.0
  %255 = vmatpush1.msra.mxu0 0.0
  %256 = vmatprep.subr.mxu0 0.0
  %257 = vmatpush1.msra.mxu0 0.0
  %258 = vmatprep.subr.mxu0 0.0
  %259 = vmatpush1.msra.mxu0 0.0
  %260 = vmatprep.subr.mxu0 0.0
  %261 = vmatpush1.msra.mxu0 0.0
  %262 = vmatprep.subr.mxu0 0.0
  %263 = vmatpush1.msra.mxu0 0.0
  %264 = vmatprep.subr.mxu0 0.0
  %265 = vmatpush1.msra.mxu0 0.0
  %266 = vmatprep.subr.mxu0 0.0
  %267 = vmatpush1.msra.mxu0 0.0
  %268 = vmatprep.subr.mxu0 0.0
  %269 = vmatpush1.msra.mxu0 0.0
  %270 = vmatprep.subr.mxu0 0.0
  %271 = vmatpush1.msra.mxu0 0.0
  %272 = vmatprep.subr.mxu0 0.0
  %273 = vmatpush1.msra.mxu0 0.0
  %274 = vmatprep.subr.mxu0 0.0
  %275 = vmatpush1.msra.mxu0 0.0
  %276 = vmatprep.subr.mxu0 0.0
  %277 = vmatpush1.msra.mxu0 0.0
  %278 = vmatprep.subr.mxu0 0.0
  %279 = vmatpush1.msra.mxu0 0.0
  %280 = vmatprep.mubr.f32.mxu0 0.0
  %281 = vmatmul.mubr.f32.gmra.mrb[0].mxu0 %v214
  %v282 = vpop.f32.mrb[0].mxu0
  %v283 = vadd.f32 0.0, %v282
  %v284 = vpop.f32.mrb[0].mxu0
  %285 = vdwg.mxu0
  %v286 = vsel %vm134, %v283, -inf
  %287 = vmax.xlane.f32.xlu0 %v286
  %v288 = vpop.xlane.xlu0 %287
  %v289 = vsub.f32 %v283, %v288
  %v290 = vmul.f32 %v289, 1.442695
  %v291 = vpow.pop %v290
  %v292 = vsel %vm134, %v291, 0.0
  %293 = vadd.xlane.f32.xlu0 %v292
  %v294 = vpop.xlane.xlu0 %293
  %v295 = vrcp.pop %v294
  %v296 = vmul.f32 %v291, %v295
  %v297 = vmul.f32 %v283, %v296
  %v298 = vsel %vm134, %v297, 0.0
  %299 = vadd.xlane.f32.xlu0 %v298
  %v300 = vpop.xlane.xlu0 %299
  %v301 = vlaneseq
  %v302 = vshrl.u32 %v301, 7
  %v303 = vsub.s32 1, %v302
  %v304 = vrot.slane %v37, %v303
  %v305 = vmul.f32 %v132, %v304
  %v306 = vsel %vm47, %v305, 0.0
  %307 = vadd.xlane.f32.xlu0 %v306
  %v308 = vpop.xlane.xlu0 %307
  %v309 = vlaneseq
  %v310 = vshrl.u32 %v309, 7
  %v311 = vsub.s32 2, %v310
  %v312 = vrot.slane %v37, %v311
  %v313 = vmul.f32 %v133, %v312
  %v314 = vsel %vm47, %v313, 0.0
  %315 = vadd.xlane.f32.xlu0 %v314
  %v316 = vpop.xlane.xlu0 %315
  %v317 = vadd.f32 %v308, %v316
  %vm318 = vcmp.eq.s32.totalorder %v130, 0
  %v319 = vsel %vm318, 1, 0
  %vm320 = vcmp.eq.s32.totalorder %v319, 1
  %v321 = vsel %vm320, %v300, 0.0
  %v322 = vsel %vm320, %v317, 0.0
  %323 = vrot.lane.b32.xlu0 %v131, 112
  %v324 = vpop.permute.xlu0 %323
  %v325 = vsel %vm134, %v324, 0
  %327 = vmatprep.subr.mxu0 0.0
  %328 = vmatpush1.msra.mxu0 %v42
  %329 = vmatprep.subr.mxu0 0.0
  %330 = vmatpush1.msra.mxu0 %v43
  %331 = vmatprep.subr.mxu0 0.0
  %332 = vmatpush1.msra.mxu0 0.0
  %333 = vmatprep.subr.mxu0 0.0
  %334 = vmatpush1.msra.mxu0 0.0
  %335 = vmatprep.subr.mxu0 0.0
  %336 = vmatpush1.msra.mxu0 0.0
  %337 = vmatprep.subr.mxu0 0.0
  %338 = vmatpush1.msra.mxu0 0.0
  %339 = vmatprep.subr.mxu0 0.0
  %340 = vmatpush1.msra.mxu0 0.0
  %341 = vmatprep.subr.mxu0 0.0
  %342 = vmatpush1.msra.mxu0 0.0
  %343 = vmatprep.subr.mxu0 0.0
  %344 = vmatpush1.msra.mxu0 0.0
  %345 = vmatprep.subr.mxu0 0.0
  %346 = vmatpush1.msra.mxu0 0.0
  %347 = vmatprep.subr.mxu0 0.0
  %348 = vmatpush1.msra.mxu0 0.0
  %349 = vmatprep.subr.mxu0 0.0
  %350 = vmatpush1.msra.mxu0 0.0
  %351 = vmatprep.subr.mxu0 0.0
  %352 = vmatpush1.msra.mxu0 0.0
  %353 = vmatprep.subr.mxu0 0.0
  %354 = vmatpush1.msra.mxu0 0.0
  %355 = vmatprep.subr.mxu0 0.0
  %356 = vmatpush1.msra.mxu0 0.0
  %357 = vmatprep.subr.mxu0 0.0
  %358 = vmatpush1.msra.mxu0 0.0
  %359 = vmatprep.subr.mxu0 0.0
  %360 = vmatpush1.msra.mxu0 0.0
  %361 = vmatprep.subr.mxu0 0.0
  %362 = vmatpush1.msra.mxu0 0.0
  %363 = vmatprep.subr.mxu0 0.0
  %364 = vmatpush1.msra.mxu0 0.0
  %365 = vmatprep.subr.mxu0 0.0
  %366 = vmatpush1.msra.mxu0 0.0
  %367 = vmatprep.subr.mxu0 0.0
  %368 = vmatpush1.msra.mxu0 0.0
  %369 = vmatprep.subr.mxu0 0.0
  %370 = vmatpush1.msra.mxu0 0.0
  %371 = vmatprep.subr.mxu0 0.0
  %372 = vmatpush1.msra.mxu0 0.0
  %373 = vmatprep.subr.mxu0 0.0
  %374 = vmatpush1.msra.mxu0 0.0
  %375 = vmatprep.subr.mxu0 0.0
  %376 = vmatpush1.msra.mxu0 0.0
  %377 = vmatprep.subr.mxu0 0.0
  %378 = vmatpush1.msra.mxu0 0.0
  %379 = vmatprep.subr.mxu0 0.0
  %380 = vmatpush1.msra.mxu0 0.0
  %381 = vmatprep.subr.mxu0 0.0
  %382 = vmatpush1.msra.mxu0 0.0
  %383 = vmatprep.subr.mxu0 0.0
  %384 = vmatpush1.msra.mxu0 0.0
  %385 = vmatprep.subr.mxu0 0.0
  %386 = vmatpush1.msra.mxu0 0.0
  %387 = vmatprep.subr.mxu0 0.0
  %388 = vmatpush1.msra.mxu0 0.0
  %389 = vmatprep.subr.mxu0 0.0
  %390 = vmatpush1.msra.mxu0 0.0
  %391 = vmatprep.mubr.f32.mxu0 0.0
  %392 = vmatmul.mubr.f32.gmra.mrb[0].mxu0 %v325
  %v393 = vpop.f32.mrb[0].mxu0
  %v394 = vadd.f32 %v118, %v393
  %v395 = vpop.f32.mrb[0].mxu0
  %396 = vdwg.mxu0
  %v397 = vadd.f32 %v394, %v211
  %v399 = vsel %vm134, %v397, 0
  %401 = vmatprep.subr.mxu0 0.0
  %402 = vmatpush1.msra.mxu0 %v44
  %403 = vmatprep.subr.mxu0 0.0
  %404 = vmatpush1.msra.mxu0 %v45
  %405 = vmatprep.subr.mxu0 0.0
  %406 = vmatpush1.msra.mxu0 0.0
  %407 = vmatprep.subr.mxu0 0.0
  %408 = vmatpush1.msra.mxu0 0.0
  %409 = vmatprep.subr.mxu0 0.0
  %410 = vmatpush1.msra.mxu0 0.0
  %411 = vmatprep.subr.mxu0 0.0
  %412 = vmatpush1.msra.mxu0 0.0
  %413 = vmatprep.subr.mxu0 0.0
  %414 = vmatpush1.msra.mxu0 0.0
  %415 = vmatprep.subr.mxu0 0.0
  %416 = vmatpush1.msra.mxu0 0.0
  %417 = vmatprep.subr.mxu0 0.0
  %418 = vmatpush1.msra.mxu0 0.0
  %419 = vmatprep.subr.mxu0 0.0
  %420 = vmatpush1.msra.mxu0 0.0
  %421 = vmatprep.subr.mxu0 0.0
  %422 = vmatpush1.msra.mxu0 0.0
  %423 = vmatprep.subr.mxu0 0.0
  %424 = vmatpush1.msra.mxu0 0.0
  %425 = vmatprep.subr.mxu0 0.0
  %426 = vmatpush1.msra.mxu0 0.0
  %427 = vmatprep.subr.mxu0 0.0
  %428 = vmatpush1.msra.mxu0 0.0
  %429 = vmatprep.subr.mxu0 0.0
  %430 = vmatpush1.msra.mxu0 0.0
  %431 = vmatprep.subr.mxu0 0.0
  %432 = vmatpush1.msra.mxu0 0.0
  %433 = vmatprep.subr.mxu0 0.0
  %434 = vmatpush1.msra.mxu0 0.0
  %435 = vmatprep.subr.mxu0 0.0
  %436 = vmatpush1.msra.mxu0 0.0
  %437 = vmatprep.subr.mxu0 0.0
  %438 = vmatpush1.msra.mxu0 0.0
  %439 = vmatprep.subr.mxu0 0.0
  %440 = vmatpush1.msra.mxu0 0.0
  %441 = vmatprep.subr.mxu0 0.0
  %442 = vmatpush1.msra.mxu0 0.0
  %443 = vmatprep.subr.mxu0 0.0
  %444 = vmatpush1.msra.mxu0 0.0
  %445 = vmatprep.subr.mxu0 0.0
  %446 = vmatpush1.msra.mxu0 0.0
  %447 = vmatprep.subr.mxu0 0.0
  %448 = vmatpush1.msra.mxu0 0.0
  %449 = vmatprep.subr.mxu0 0.0
  %450 = vmatpush1.msra.mxu0 0.0
  %451 = vmatprep.subr.mxu0 0.0
  %452 = vmatpush1.msra.mxu0 0.0
  %453 = vmatprep.subr.mxu0 0.0
  %454 = vmatpush1.msra.mxu0 0.0
  %455 = vmatprep.subr.mxu0 0.0
  %456 = vmatpush1.msra.mxu0 0.0
  %457 = vmatprep.subr.mxu0 0.0
  %458 = vmatpush1.msra.mxu0 0.0
  %459 = vmatprep.subr.mxu0 0.0
  %460 = vmatpush1.msra.mxu0 0.0
  %461 = vmatprep.subr.mxu0 0.0
  %462 = vmatpush1.msra.mxu0 0.0
  %463 = vmatprep.subr.mxu0 0.0
  %464 = vmatpush1.msra.mxu0 0.0
  %465 = vmatprep.mubr.f32.mxu0 0.0
  %466 = vmatmul.mubr.f32.gmra.mrb[0].mxu0 %v399
  %v467 = vpop.f32.mrb[0].mxu0
  %v468 = vadd.f32 0.0, %v467
  %v469 = vpop.f32.mrb[0].mxu0
  %470 = vdwg.mxu0
  %v471 = vsel %vm134, %v468, -inf
  %472 = vmax.xlane.f32.xlu0 %v471
  %v473 = vpop.xlane.xlu0 %472
  %v474 = vsub.f32 %v468, %v473
  %v475 = vmul.f32 %v474, 1.442695
  %v476 = vpow.pop %v475
  %v477 = vsel %vm134, %v476, 0.0
  %478 = vadd.xlane.f32.xlu0 %v477
  %v479 = vpop.xlane.xlu0 %478
  %v480 = vrcp.pop %v479
  %v481 = vmul.f32 %v476, %v480
  %v482 = vmul.f32 %v468, %v481
  %v483 = vsel %vm134, %v482, 0.0
  %484 = vadd.xlane.f32.xlu0 %v483
  %v485 = vpop.xlane.xlu0 %484
  %487 = vrot.lane.b32.xlu0 %v304, 32
  %v488 = vpop.permute.xlu0 %487
  %v490 = vmul.f32 %v132, %v488
  %492 = vrot.lane.b32.xlu0 %v490, 96
  %v493 = vpop.permute.xlu0 %492
  %v495 = vsel %vm47, %v493, 0.0
  %496 = vadd.xlane.f32.xlu0 %v495
  %v497 = vpop.xlane.xlu0 %496
  %499 = vrot.lane.b32.xlu0 %v312, 32
  %v500 = vpop.permute.xlu0 %499
  %v502 = vmul.f32 %v133, %v500
  %504 = vrot.lane.b32.xlu0 %v502, 96
  %v505 = vpop.permute.xlu0 %504
  %v507 = vsel %vm47, %v505, 0.0
  %508 = vadd.xlane.f32.xlu0 %v507
  %v509 = vpop.xlane.xlu0 %508
  %v510 = vadd.f32 %v497, %v509
  %vm511 = vcmp.eq.s32.totalorder %v130, 1
  %v512 = vsel %vm511, 1, 0
  %vm513 = vcmp.eq.s32.totalorder %v512, 1
  %v514 = vsel %vm513, %v485, %v321
  %v515 = vsel %vm513, %v510, %v322
  %516 = vrot.lane.b32.xlu0 %v131, 96
  %v517 = vpop.permute.xlu0 %516
  %v518 = vsel %vm134, %v517, 0
  %520 = vmatprep.subr.mxu0 0.0
  %521 = vmatpush1.msra.mxu0 %v42
  %522 = vmatprep.subr.mxu0 0.0
  %523 = vmatpush1.msra.mxu0 %v43
  %524 = vmatprep.subr.mxu0 0.0
  %525 = vmatpush1.msra.mxu0 0.0
  %526 = vmatprep.subr.mxu0 0.0
  %527 = vmatpush1.msra.mxu0 0.0
  %528 = vmatprep.subr.mxu0 0.0
  %529 = vmatpush1.msra.mxu0 0.0
  %530 = vmatprep.subr.mxu0 0.0
  %531 = vmatpush1.msra.mxu0 0.0
  %532 = vmatprep.subr.mxu0 0.0
  %533 = vmatpush1.msra.mxu0 0.0
  %534 = vmatprep.subr.mxu0 0.0
  %535 = vmatpush1.msra.mxu0 0.0
  %536 = vmatprep.subr.mxu0 0.0
  %537 = vmatpush1.msra.mxu0 0.0
  %538 = vmatprep.subr.mxu0 0.0
  %539 = vmatpush1.msra.mxu0 0.0
  %540 = vmatprep.subr.mxu0 0.0
  %541 = vmatpush1.msra.mxu0 0.0
  %542 = vmatprep.subr.mxu0 0.0
  %543 = vmatpush1.msra.mxu0 0.0
  %544 = vmatprep.subr.mxu0 0.0
  %545 = vmatpush1.msra.mxu0 0.0
  %546 = vmatprep.subr.mxu0 0.0
  %547 = vmatpush1.msra.mxu0 0.0
  %548 = vmatprep.subr.mxu0 0.0
  %549 = vmatpush1.msra.mxu0 0.0
  %550 = vmatprep.subr.mxu0 0.0
  %551 = vmatpush1.msra.mxu0 0.0
  %552 = vmatprep.subr.mxu0 0.0
  %553 = vmatpush1.msra.mxu0 0.0
  %554 = vmatprep.subr.mxu0 0.0
  %555 = vmatpush1.msra.mxu0 0.0
  %556 = vmatprep.subr.mxu0 0.0
  %557 = vmatpush1.msra.mxu0 0.0
  %558 = vmatprep.subr.mxu0 0.0
  %559 = vmatpush1.msra.mxu0 0.0
  %560 = vmatprep.subr.mxu0 0.0
  %561 = vmatpush1.msra.mxu0 0.0
  %562 = vmatprep.subr.mxu0 0.0
  %563 = vmatpush1.msra.mxu0 0.0
  %564 = vmatprep.subr.mxu0 0.0
  %565 = vmatpush1.msra.mxu0 0.0
  %566 = vmatprep.subr.mxu0 0.0
  %567 = vmatpush1.msra.mxu0 0.0
  %568 = vmatprep.subr.mxu0 0.0
  %569 = vmatpush1.msra.mxu0 0.0
  %570 = vmatprep.subr.mxu0 0.0
  %571 = vmatpush1.msra.mxu0 0.0
  %572 = vmatprep.subr.mxu0 0.0
  %573 = vmatpush1.msra.mxu0 0.0
  %574 = vmatprep.subr.mxu0 0.0
  %575 = vmatpush1.msra.mxu0 0.0
  %576 = vmatprep.subr.mxu0 0.0
  %577 = vmatpush1.msra.mxu0 0.0
  %578 = vmatprep.subr.mxu0 0.0
  %579 = vmatpush1.msra.mxu0 0.0
  %580 = vmatprep.subr.mxu0 0.0
  %581 = vmatpush1.msra.mxu0 0.0
  %582 = vmatprep.subr.mxu0 0.0
  %583 = vmatpush1.msra.mxu0 0.0
  %584 = vmatprep.mubr.f32.mxu0 0.0
  %585 = vmatmul.mubr.f32.gmra.mrb[0].mxu0 %v518
  %v586 = vpop.f32.mrb[0].mxu0
  %v587 = vadd.f32 %v118, %v586
  %v588 = vpop.f32.mrb[0].mxu0
  %589 = vdwg.mxu0
  %v590 = vadd.f32 %v587, %v211
  %v592 = vsel %vm134, %v590, 0
  %594 = vmatprep.subr.mxu0 0.0
  %595 = vmatpush1.msra.mxu0 %v44
  %596 = vmatprep.subr.mxu0 0.0
  %597 = vmatpush1.msra.mxu0 %v45
  %598 = vmatprep.subr.mxu0 0.0
  %599 = vmatpush1.msra.mxu0 0.0
  %600 = vmatprep.subr.mxu0 0.0
  %601 = vmatpush1.msra.mxu0 0.0
  %602 = vmatprep.subr.mxu0 0.0
  %603 = vmatpush1.msra.mxu0 0.0
  %604 = vmatprep.subr.mxu0 0.0
  %605 = vmatpush1.msra.mxu0 0.0
  %606 = vmatprep.subr.mxu0 0.0
  %607 = vmatpush1.msra.mxu0 0.0
  %608 = vmatprep.subr.mxu0 0.0
  %609 = vmatpush1.msra.mxu0 0.0
  %610 = vmatprep.subr.mxu0 0.0
  %611 = vmatpush1.msra.mxu0 0.0
  %612 = vmatprep.subr.mxu0 0.0
  %613 = vmatpush1.msra.mxu0 0.0
  %614 = vmatprep.subr.mxu0 0.0
  %615 = vmatpush1.msra.mxu0 0.0
  %616 = vmatprep.subr.mxu0 0.0
  %617 = vmatpush1.msra.mxu0 0.0
  %618 = vmatprep.subr.mxu0 0.0
  %619 = vmatpush1.msra.mxu0 0.0
  %620 = vmatprep.subr.mxu0 0.0
  %621 = vmatpush1.msra.mxu0 0.0
  %622 = vmatprep.subr.mxu0 0.0
  %623 = vmatpush1.msra.mxu0 0.0
  %624 = vmatprep.subr.mxu0 0.0
  %625 = vmatpush1.msra.mxu0 0.0
  %626 = vmatprep.subr.mxu0 0.0
  %627 = vmatpush1.msra.mxu0 0.0
  %628 = vmatprep.subr.mxu0 0.0
  %629 = vmatpush1.msra.mxu0 0.0
  %630 = vmatprep.subr.mxu0 0.0
  %631 = vmatpush1.msra.mxu0 0.0
  %632 = vmatprep.subr.mxu0 0.0
  %633 = vmatpush1.msra.mxu0 0.0
  %634 = vmatprep.subr.mxu0 0.0
  %635 = vmatpush1.msra.mxu0 0.0
  %636 = vmatprep.subr.mxu0 0.0
  %637 = vmatpush1.msra.mxu0 0.0
  %638 = vmatprep.subr.mxu0 0.0
  %639 = vmatpush1.msra.mxu0 0.0
  %640 = vmatprep.subr.mxu0 0.0
  %641 = vmatpush1.msra.mxu0 0.0
  %642 = vmatprep.subr.mxu0 0.0
  %643 = vmatpush1.msra.mxu0 0.0
  %644 = vmatprep.subr.mxu0 0.0
  %645 = vmatpush1.msra.mxu0 0.0
  %646 = vmatprep.subr.mxu0 0.0
  %647 = vmatpush1.msra.mxu0 0.0
  %648 = vmatprep.subr.mxu0 0.0
  %649 = vmatpush1.msra.mxu0 0.0
  %650 = vmatprep.subr.mxu0 0.0
  %651 = vmatpush1.msra.mxu0 0.0
  %652 = vmatprep.subr.mxu0 0.0
  %653 = vmatpush1.msra.mxu0 0.0
  %654 = vmatprep.subr.mxu0 0.0
  %655 = vmatpush1.msra.mxu0 0.0
  %656 = vmatprep.subr.mxu0 0.0
  %657 = vmatpush1.msra.mxu0 0.0
  %658 = vmatprep.mubr.f32.mxu0 0.0
  %659 = vmatmul.mubr.f32.gmra.mrb[0].mxu0 %v592
  %v660 = vpop.f32.mrb[0].mxu0
  %v661 = vadd.f32 0.0, %v660
  %v662 = vpop.f32.mrb[0].mxu0
  %663 = vdwg.mxu0
  %v664 = vsel %vm134, %v661, -inf
  %665 = vmax.xlane.f32.xlu0 %v664
  %v666 = vpop.xlane.xlu0 %665
  %v667 = vsub.f32 %v661, %v666
  %v668 = vmul.f32 %v667, 1.442695
  %v669 = vpow.pop %v668
  %v670 = vsel %vm134, %v669, 0.0
  %671 = vadd.xlane.f32.xlu0 %v670
  %v672 = vpop.xlane.xlu0 %671
  %v673 = vrcp.pop %v672
  %v674 = vmul.f32 %v669, %v673
  %v675 = vmul.f32 %v661, %v674
  %v676 = vsel %vm134, %v675, 0.0
  %677 = vadd.xlane.f32.xlu0 %v676
  %v678 = vpop.xlane.xlu0 %677
  %679 = vrot.lane.b32.xlu0 %v304, 64
  %v680 = vpop.permute.xlu0 %679
  %v682 = vmul.f32 %v132, %v680
  %684 = vrot.lane.b32.xlu0 %v682, 64
  %v685 = vpop.permute.xlu0 %684
  %v687 = vsel %vm47, %v685, 0.0
  %688 = vadd.xlane.f32.xlu0 %v687
  %v689 = vpop.xlane.xlu0 %688
  %690 = vrot.lane.b32.xlu0 %v312, 64
  %v691 = vpop.permute.xlu0 %690
  %v693 = vmul.f32 %v133, %v691
  %695 = vrot.lane.b32.xlu0 %v693, 64
  %v696 = vpop.permute.xlu0 %695
  %v698 = vsel %vm47, %v696, 0.0
  %699 = vadd.xlane.f32.xlu0 %v698
  %v700 = vpop.xlane.xlu0 %699
  %v701 = vadd.f32 %v689, %v700
  %vm702 = vcmp.eq.s32.totalorder %v130, 2
  %v703 = vsel %vm702, 1, 0
  %vm704 = vcmp.eq.s32.totalorder %v703, 1
  %v705 = vsel %vm704, %v678, %v514
  %v706 = vsel %vm704, %v701, %v515
  %707 = vrot.lane.b32.xlu0 %v131, 80
  %v708 = vpop.permute.xlu0 %707
  %v709 = vsel %vm134, %v708, 0
  %711 = vmatprep.subr.mxu0 0.0
  %712 = vmatpush1.msra.mxu0 %v42
  %713 = vmatprep.subr.mxu0 0.0
  %714 = vmatpush1.msra.mxu0 %v43
  %715 = vmatprep.subr.mxu0 0.0
  %716 = vmatpush1.msra.mxu0 0.0
  %717 = vmatprep.subr.mxu0 0.0
  %718 = vmatpush1.msra.mxu0 0.0
  %719 = vmatprep.subr.mxu0 0.0
  %720 = vmatpush1.msra.mxu0 0.0
  %721 = vmatprep.subr.mxu0 0.0
  %722 = vmatpush1.msra.mxu0 0.0
  %723 = vmatprep.subr.mxu0 0.0
  %724 = vmatpush1.msra.mxu0 0.0
  %725 = vmatprep.subr.mxu0 0.0
  %726 = vmatpush1.msra.mxu0 0.0
  %727 = vmatprep.subr.mxu0 0.0
  %728 = vmatpush1.msra.mxu0 0.0
  %729 = vmatprep.subr.mxu0 0.0
  %730 = vmatpush1.msra.mxu0 0.0
  %731 = vmatprep.subr.mxu0 0.0
  %732 = vmatpush1.msra.mxu0 0.0
  %733 = vmatprep.subr.mxu0 0.0
  %734 = vmatpush1.msra.mxu0 0.0
  %735 = vmatprep.subr.mxu0 0.0
  %736 = vmatpush1.msra.mxu0 0.0
  %737 = vmatprep.subr.mxu0 0.0
  %738 = vmatpush1.msra.mxu0 0.0
  %739 = vmatprep.subr.mxu0 0.0
  %740 = vmatpush1.msra.mxu0 0.0
  %741 = vmatprep.subr.mxu0 0.0
  %742 = vmatpush1.msra.mxu0 0.0
  %743 = vmatprep.subr.mxu0 0.0
  %744 = vmatpush1.msra.mxu0 0.0
  %745 = vmatprep.subr.mxu0 0.0
  %746 = vmatpush1.msra.mxu0 0.0
  %747 = vmatprep.subr.mxu0 0.0
  %748 = vmatpush1.msra.mxu0 0.0
  %749 = vmatprep.subr.mxu0 0.0
  %750 = vmatpush1.msra.mxu0 0.0
  %751 = vmatprep.subr.mxu0 0.0
  %752 = vmatpush1.msra.mxu0 0.0
  %753 = vmatprep.subr.mxu0 0.0
  %754 = vmatpush1.msra.mxu0 0.0
  %755 = vmatprep.subr.mxu0 0.0
  %756 = vmatpush1.msra.mxu0 0.0
  %757 = vmatprep.subr.mxu0 0.0
  %758 = vmatpush1.msra.mxu0 0.0
  %759 = vmatprep.subr.mxu0 0.0
  %760 = vmatpush1.msra.mxu0 0.0
  %761 = vmatprep.subr.mxu0 0.0
  %762 = vmatpush1.msra.mxu0 0.0
  %763 = vmatprep.subr.mxu0 0.0
  %764 = vmatpush1.msra.mxu0 0.0
  %765 = vmatprep.subr.mxu0 0.0
  %766 = vmatpush1.msra.mxu0 0.0
  %767 = vmatprep.subr.mxu0 0.0
  %768 = vmatpush1.msra.mxu0 0.0
  %769 = vmatprep.subr.mxu0 0.0
  %770 = vmatpush1.msra.mxu0 0.0
  %771 = vmatprep.subr.mxu0 0.0
  %772 = vmatpush1.msra.mxu0 0.0
  %773 = vmatprep.subr.mxu0 0.0
  %774 = vmatpush1.msra.mxu0 0.0
  %775 = vmatprep.mubr.f32.mxu0 0.0
  %776 = vmatmul.mubr.f32.gmra.mrb[0].mxu0 %v709
  %v777 = vpop.f32.mrb[0].mxu0
  %v778 = vadd.f32 %v118, %v777
  %v779 = vpop.f32.mrb[0].mxu0
  %780 = vdwg.mxu0
  %v781 = vadd.f32 %v778, %v211
  %v783 = vsel %vm134, %v781, 0
  %785 = vmatprep.subr.mxu0 0.0
  %786 = vmatpush1.msra.mxu0 %v44
  %787 = vmatprep.subr.mxu0 0.0
  %788 = vmatpush1.msra.mxu0 %v45
  %789 = vmatprep.subr.mxu0 0.0
  %790 = vmatpush1.msra.mxu0 0.0
  %791 = vmatprep.subr.mxu0 0.0
  %792 = vmatpush1.msra.mxu0 0.0
  %793 = vmatprep.subr.mxu0 0.0
  %794 = vmatpush1.msra.mxu0 0.0
  %795 = vmatprep.subr.mxu0 0.0
  %796 = vmatpush1.msra.mxu0 0.0
  %797 = vmatprep.subr.mxu0 0.0
  %798 = vmatpush1.msra.mxu0 0.0
  %799 = vmatprep.subr.mxu0 0.0
  %800 = vmatpush1.msra.mxu0 0.0
  %801 = vmatprep.subr.mxu0 0.0
  %802 = vmatpush1.msra.mxu0 0.0
  %803 = vmatprep.subr.mxu0 0.0
  %804 = vmatpush1.msra.mxu0 0.0
  %805 = vmatprep.subr.mxu0 0.0
  %806 = vmatpush1.msra.mxu0 0.0
  %807 = vmatprep.subr.mxu0 0.0
  %808 = vmatpush1.msra.mxu0 0.0
  %809 = vmatprep.subr.mxu0 0.0
  %810 = vmatpush1.msra.mxu0 0.0
  %811 = vmatprep.subr.mxu0 0.0
  %812 = vmatpush1.msra.mxu0 0.0
  %813 = vmatprep.subr.mxu0 0.0
  %814 = vmatpush1.msra.mxu0 0.0
  %815 = vmatprep.subr.mxu0 0.0
  %816 = vmatpush1.msra.mxu0 0.0
  %817 = vmatprep.subr.mxu0 0.0
  %818 = vmatpush1.msra.mxu0 0.0
  %819 = vmatprep.subr.mxu0 0.0
  %820 = vmatpush1.msra.mxu0 0.0
  %821 = vmatprep.subr.mxu0 0.0
  %822 = vmatpush1.msra.mxu0 0.0
  %823 = vmatprep.subr.mxu0 0.0
  %824 = vmatpush1.msra.mxu0 0.0
  %825 = vmatprep.subr.mxu0 0.0
  %826 = vmatpush1.msra.mxu0 0.0
  %827 = vmatprep.subr.mxu0 0.0
  %828 = vmatpush1.msra.mxu0 0.0
  %829 = vmatprep.subr.mxu0 0.0
  %830 = vmatpush1.msra.mxu0 0.0
  %831 = vmatprep.subr.mxu0 0.0
  %832 = vmatpush1.msra.mxu0 0.0
  %833 = vmatprep.subr.mxu0 0.0
  %834 = vmatpush1.msra.mxu0 0.0
  %835 = vmatprep.subr.mxu0 0.0
  %836 = vmatpush1.msra.mxu0 0.0
  %837 = vmatprep.subr.mxu0 0.0
  %838 = vmatpush1.msra.mxu0 0.0
  %839 = vmatprep.subr.mxu0 0.0
  %840 = vmatpush1.msra.mxu0 0.0
  %841 = vmatprep.subr.mxu0 0.0
  %842 = vmatpush1.msra.mxu0 0.0
  %843 = vmatprep.subr.mxu0 0.0
  %844 = vmatpush1.msra.mxu0 0.0
  %845 = vmatprep.subr.mxu0 0.0
  %846 = vmatpush1.msra.mxu0 0.0
  %847 = vmatprep.subr.mxu0 0.0
  %848 = vmatpush1.msra.mxu0 0.0
  %849 = vmatprep.mubr.f32.mxu0 0.0
  %850 = vmatmul.mubr.f32.gmra.mrb[0].mxu0 %v783
  %v851 = vpop.f32.mrb[0].mxu0
  %v852 = vadd.f32 0.0, %v851
  %v853 = vpop.f32.mrb[0].mxu0
  %854 = vdwg.mxu0
  %v855 = vsel %vm134, %v852, -inf
  %856 = vmax.xlane.f32.xlu0 %v855
  %v857 = vpop.xlane.xlu0 %856
  %v858 = vsub.f32 %v852, %v857
  %v859 = vmul.f32 %v858, 1.442695
  %v860 = vpow.pop %v859
  %v861 = vsel %vm134, %v860, 0.0
  %862 = vadd.xlane.f32.xlu0 %v861
  %v863 = vpop.xlane.xlu0 %862
  %v864 = vrcp.pop %v863
  %v865 = vmul.f32 %v860, %v864
  %v866 = vmul.f32 %v852, %v865
  %v867 = vsel %vm134, %v866, 0.0
  %868 = vadd.xlane.f32.xlu0 %v867
  %v869 = vpop.xlane.xlu0 %868
  %870 = vrot.lane.b32.xlu0 %v304, 96
  %v871 = vpop.permute.xlu0 %870
  %v873 = vmul.f32 %v132, %v871
  %875 = vrot.lane.b32.xlu0 %v873, 32
  %v876 = vpop.permute.xlu0 %875
  %v878 = vsel %vm47, %v876, 0.0
  %879 = vadd.xlane.f32.xlu0 %v878
  %v880 = vpop.xlane.xlu0 %879
  %881 = vrot.lane.b32.xlu0 %v312, 96
  %v882 = vpop.permute.xlu0 %881
  %v884 = vmul.f32 %v133, %v882
  %886 = vrot.lane.b32.xlu0 %v884, 32
  %v887 = vpop.permute.xlu0 %886
  %v889 = vsel %vm47, %v887, 0.0
  %890 = vadd.xlane.f32.xlu0 %v889
  %v891 = vpop.xlane.xlu0 %890
  %v892 = vadd.f32 %v880, %v891
  %vm893 = vcmp.eq.s32.totalorder %v130, 3
  %v894 = vsel %vm893, 1, 0
  %vm895 = vcmp.eq.s32.totalorder %v894, 1
  %v896 = vsel %vm895, %v869, %v705
  %v897 = vsel %vm895, %v892, %v706
  %v898 = vld [vmem:[%s1 + $0x8] sm:$0xff]
  %v899 = vld [vmem:[%s2 + $0x8] sm:$0xff]
  %900 = vrot.lane.b32.xlu0 %v131, 64
  %v901 = vpop.permute.xlu0 %900
  %v902 = vsel %vm134, %v901, 0
  %904 = vmatprep.subr.mxu0 0.0
  %905 = vmatpush1.msra.mxu0 %v42
  %906 = vmatprep.subr.mxu0 0.0
  %907 = vmatpush1.msra.mxu0 %v43
  %908 = vmatprep.subr.mxu0 0.0
  %909 = vmatpush1.msra.mxu0 0.0
  %910 = vmatprep.subr.mxu0 0.0
  %911 = vmatpush1.msra.mxu0 0.0
  %912 = vmatprep.subr.mxu0 0.0
  %913 = vmatpush1.msra.mxu0 0.0
  %914 = vmatprep.subr.mxu0 0.0
  %915 = vmatpush1.msra.mxu0 0.0
  %916 = vmatprep.subr.mxu0 0.0
  %917 = vmatpush1.msra.mxu0 0.0
  %918 = vmatprep.subr.mxu0 0.0
  %919 = vmatpush1.msra.mxu0 0.0
  %920 = vmatprep.subr.mxu0 0.0
  %921 = vmatpush1.msra.mxu0 0.0
  %922 = vmatprep.subr.mxu0 0.0
  %923 = vmatpush1.msra.mxu0 0.0
  %924 = vmatprep.subr.mxu0 0.0
  %925 = vmatpush1.msra.mxu0 0.0
  %926 = vmatprep.subr.mxu0 0.0
  %927 = vmatpush1.msra.mxu0 0.0
  %928 = vmatprep.subr.mxu0 0.0
  %929 = vmatpush1.msra.mxu0 0.0
  %930 = vmatprep.subr.mxu0 0.0
  %931 = vmatpush1.msra.mxu0 0.0
  %932 = vmatprep.subr.mxu0 0.0
  %933 = vmatpush1.msra.mxu0 0.0
  %934 = vmatprep.subr.mxu0 0.0
  %935 = vmatpush1.msra.mxu0 0.0
  %936 = vmatprep.subr.mxu0 0.0
  %937 = vmatpush1.msra.mxu0 0.0
  %938 = vmatprep.subr.mxu0 0.0
  %939 = vmatpush1.msra.mxu0 0.0
  %940 = vmatprep.subr.mxu0 0.0
  %941 = vmatpush1.msra.mxu0 0.0
  %942 = vmatprep.subr.mxu0 0.0
  %943 = vmatpush1.msra.mxu0 0.0
  %944 = vmatprep.subr.mxu0 0.0
  %945 = vmatpush1.msra.mxu0 0.0
  %946 = vmatprep.subr.mxu0 0.0
  %947 = vmatpush1.msra.mxu0 0.0
  %948 = vmatprep.subr.mxu0 0.0
  %949 = vmatpush1.msra.mxu0 0.0
  %950 = vmatprep.subr.mxu0 0.0
  %951 = vmatpush1.msra.mxu0 0.0
  %952 = vmatprep.subr.mxu0 0.0
  %953 = vmatpush1.msra.mxu0 0.0
  %954 = vmatprep.subr.mxu0 0.0
  %955 = vmatpush1.msra.mxu0 0.0
  %956 = vmatprep.subr.mxu0 0.0
  %957 = vmatpush1.msra.mxu0 0.0
  %958 = vmatprep.subr.mxu0 0.0
  %959 = vmatpush1.msra.mxu0 0.0
  %960 = vmatprep.subr.mxu0 0.0
  %961 = vmatpush1.msra.mxu0 0.0
  %962 = vmatprep.subr.mxu0 0.0
  %963 = vmatpush1.msra.mxu0 0.0
  %964 = vmatprep.subr.mxu0 0.0
  %965 = vmatpush1.msra.mxu0 0.0
  %966 = vmatprep.subr.mxu0 0.0
  %967 = vmatpush1.msra.mxu0 0.0
  %968 = vmatprep.mubr.f32.mxu0 0.0
  %969 = vmatmul.mubr.f32.gmra.mrb[0].mxu0 %v902
  %v970 = vpop.f32.mrb[0].mxu0
  %v971 = vadd.f32 %v118, %v970
  %v972 = vpop.f32.mrb[0].mxu0
  %973 = vdwg.mxu0
  %v974 = vadd.f32 %v971, %v211
  %v976 = vsel %vm134, %v974, 0
  %978 = vmatprep.subr.mxu0 0.0
  %979 = vmatpush1.msra.mxu0 %v44
  %980 = vmatprep.subr.mxu0 0.0
  %981 = vmatpush1.msra.mxu0 %v45
  %982 = vmatprep.subr.mxu0 0.0
  %983 = vmatpush1.msra.mxu0 0.0
  %984 = vmatprep.subr.mxu0 0.0
  %985 = vmatpush1.msra.mxu0 0.0
  %986 = vmatprep.subr.mxu0 0.0
  %987 = vmatpush1.msra.mxu0 0.0
  %988 = vmatprep.subr.mxu0 0.0
  %989 = vmatpush1.msra.mxu0 0.0
  %990 = vmatprep.subr.mxu0 0.0
  %991 = vmatpush1.msra.mxu0 0.0
  %992 = vmatprep.subr.mxu0 0.0
  %993 = vmatpush1.msra.mxu0 0.0
  %994 = vmatprep.subr.mxu0 0.0
  %995 = vmatpush1.msra.mxu0 0.0
  %996 = vmatprep.subr.mxu0 0.0
  %997 = vmatpush1.msra.mxu0 0.0
  %998 = vmatprep.subr.mxu0 0.0
  %999 = vmatpush1.msra.mxu0 0.0
  %1000 = vmatprep.subr.mxu0 0.0
  %1001 = vmatpush1.msra.mxu0 0.0
  %1002 = vmatprep.subr.mxu0 0.0
  %1003 = vmatpush1.msra.mxu0 0.0
  %1004 = vmatprep.subr.mxu0 0.0
  %1005 = vmatpush1.msra.mxu0 0.0
  %1006 = vmatprep.subr.mxu0 0.0
  %1007 = vmatpush1.msra.mxu0 0.0
  %1008 = vmatprep.subr.mxu0 0.0
  %1009 = vmatpush1.msra.mxu0 0.0
  %1010 = vmatprep.subr.mxu0 0.0
  %1011 = vmatpush1.msra.mxu0 0.0
  %1012 = vmatprep.subr.mxu0 0.0
  %1013 = vmatpush1.msra.mxu0 0.0
  %1014 = vmatprep.subr.mxu0 0.0
  %1015 = vmatpush1.msra.mxu0 0.0
  %1016 = vmatprep.subr.mxu0 0.0
  %1017 = vmatpush1.msra.mxu0 0.0
  %1018 = vmatprep.subr.mxu0 0.0
  %1019 = vmatpush1.msra.mxu0 0.0
  %1020 = vmatprep.subr.mxu0 0.0
  %1021 = vmatpush1.msra.mxu0 0.0
  %1022 = vmatprep.subr.mxu0 0.0
  %1023 = vmatpush1.msra.mxu0 0.0
  %1024 = vmatprep.subr.mxu0 0.0
  %1025 = vmatpush1.msra.mxu0 0.0
  %1026 = vmatprep.subr.mxu0 0.0
  %1027 = vmatpush1.msra.mxu0 0.0
  %1028 = vmatprep.subr.mxu0 0.0
  %1029 = vmatpush1.msra.mxu0 0.0
  %1030 = vmatprep.subr.mxu0 0.0
  %1031 = vmatpush1.msra.mxu0 0.0
  %1032 = vmatprep.subr.mxu0 0.0
  %1033 = vmatpush1.msra.mxu0 0.0
  %1034 = vmatprep.subr.mxu0 0.0
  %1035 = vmatpush1.msra.mxu0 0.0
  %1036 = vmatprep.subr.mxu0 0.0
  %1037 = vmatpush1.msra.mxu0 0.0
  %1038 = vmatprep.subr.mxu0 0.0
  %1039 = vmatpush1.msra.mxu0 0.0
  %1040 = vmatprep.subr.mxu0 0.0
  %1041 = vmatpush1.msra.mxu0 0.0
  %1042 = vmatprep.mubr.f32.mxu0 0.0
  %1043 = vmatmul.mubr.f32.gmra.mrb[0].mxu0 %v976
  %v1044 = vpop.f32.mrb[0].mxu0
  %v1045 = vadd.f32 0.0, %v1044
  %v1046 = vpop.f32.mrb[0].mxu0
  %1047 = vdwg.mxu0
  %v1048 = vsel %vm134, %v1045, -inf
  %1049 = vmax.xlane.f32.xlu0 %v1048
  %v1050 = vpop.xlane.xlu0 %1049
  %v1051 = vsub.f32 %v1045, %v1050
  %v1052 = vmul.f32 %v1051, 1.442695
  %v1053 = vpow.pop %v1052
  %v1054 = vsel %vm134, %v1053, 0.0
  %1055 = vadd.xlane.f32.xlu0 %v1054
  %v1056 = vpop.xlane.xlu0 %1055
  %v1057 = vrcp.pop %v1056
  %v1058 = vmul.f32 %v1053, %v1057
  %v1059 = vmul.f32 %v1045, %v1058
  %v1060 = vsel %vm134, %v1059, 0.0
  %1061 = vadd.xlane.f32.xlu0 %v1060
  %v1062 = vpop.xlane.xlu0 %1061
  %v1063 = vmul.f32 %v898, %v304
  %v1064 = vsel %vm47, %v1063, 0.0
  %1065 = vadd.xlane.f32.xlu0 %v1064
  %v1066 = vpop.xlane.xlu0 %1065
  %v1067 = vmul.f32 %v899, %v312
  %v1068 = vsel %vm47, %v1067, 0.0
  %1069 = vadd.xlane.f32.xlu0 %v1068
  %v1070 = vpop.xlane.xlu0 %1069
  %v1071 = vadd.f32 %v1066, %v1070
  %vm1072 = vcmp.eq.s32.totalorder %v130, 4
  %v1073 = vsel %vm1072, 1, 0
  %vm1074 = vcmp.eq.s32.totalorder %v1073, 1
  %v1075 = vsel %vm1074, %v1062, %v896
  %v1076 = vsel %vm1074, %v1071, %v897
  %1077 = vrot.lane.b32.xlu0 %v131, 48
  %v1078 = vpop.permute.xlu0 %1077
  %v1079 = vsel %vm134, %v1078, 0
  %1081 = vmatprep.subr.mxu0 0.0
  %1082 = vmatpush1.msra.mxu0 %v42
  %1083 = vmatprep.subr.mxu0 0.0
  %1084 = vmatpush1.msra.mxu0 %v43
  %1085 = vmatprep.subr.mxu0 0.0
  %1086 = vmatpush1.msra.mxu0 0.0
  %1087 = vmatprep.subr.mxu0 0.0
  %1088 = vmatpush1.msra.mxu0 0.0
  %1089 = vmatprep.subr.mxu0 0.0
  %1090 = vmatpush1.msra.mxu0 0.0
  %1091 = vmatprep.subr.mxu0 0.0
  %1092 = vmatpush1.msra.mxu0 0.0
  %1093 = vmatprep.subr.mxu0 0.0
  %1094 = vmatpush1.msra.mxu0 0.0
  %1095 = vmatprep.subr.mxu0 0.0
  %1096 = vmatpush1.msra.mxu0 0.0
  %1097 = vmatprep.subr.mxu0 0.0
  %1098 = vmatpush1.msra.mxu0 0.0
  %1099 = vmatprep.subr.mxu0 0.0
  %1100 = vmatpush1.msra.mxu0 0.0
  %1101 = vmatprep.subr.mxu0 0.0
  %1102 = vmatpush1.msra.mxu0 0.0
  %1103 = vmatprep.subr.mxu0 0.0
  %1104 = vmatpush1.msra.mxu0 0.0
  %1105 = vmatprep.subr.mxu0 0.0
  %1106 = vmatpush1.msra.mxu0 0.0
  %1107 = vmatprep.subr.mxu0 0.0
  %1108 = vmatpush1.msra.mxu0 0.0
  %1109 = vmatprep.subr.mxu0 0.0
  %1110 = vmatpush1.msra.mxu0 0.0
  %1111 = vmatprep.subr.mxu0 0.0
  %1112 = vmatpush1.msra.mxu0 0.0
  %1113 = vmatprep.subr.mxu0 0.0
  %1114 = vmatpush1.msra.mxu0 0.0
  %1115 = vmatprep.subr.mxu0 0.0
  %1116 = vmatpush1.msra.mxu0 0.0
  %1117 = vmatprep.subr.mxu0 0.0
  %1118 = vmatpush1.msra.mxu0 0.0
  %1119 = vmatprep.subr.mxu0 0.0
  %1120 = vmatpush1.msra.mxu0 0.0
  %1121 = vmatprep.subr.mxu0 0.0
  %1122 = vmatpush1.msra.mxu0 0.0
  %1123 = vmatprep.subr.mxu0 0.0
  %1124 = vmatpush1.msra.mxu0 0.0
  %1125 = vmatprep.subr.mxu0 0.0
  %1126 = vmatpush1.msra.mxu0 0.0
  %1127 = vmatprep.subr.mxu0 0.0
  %1128 = vmatpush1.msra.mxu0 0.0
  %1129 = vmatprep.subr.mxu0 0.0
  %1130 = vmatpush1.msra.mxu0 0.0
  %1131 = vmatprep.subr.mxu0 0.0
  %1132 = vmatpush1.msra.mxu0 0.0
  %1133 = vmatprep.subr.mxu0 0.0
  %1134 = vmatpush1.msra.mxu0 0.0
  %1135 = vmatprep.subr.mxu0 0.0
  %1136 = vmatpush1.msra.mxu0 0.0
  %1137 = vmatprep.subr.mxu0 0.0
  %1138 = vmatpush1.msra.mxu0 0.0
  %1139 = vmatprep.subr.mxu0 0.0
  %1140 = vmatpush1.msra.mxu0 0.0
  %1141 = vmatprep.subr.mxu0 0.0
  %1142 = vmatpush1.msra.mxu0 0.0
  %1143 = vmatprep.subr.mxu0 0.0
  %1144 = vmatpush1.msra.mxu0 0.0
  %1145 = vmatprep.mubr.f32.mxu0 0.0
  %1146 = vmatmul.mubr.f32.gmra.mrb[0].mxu0 %v1079
  %v1147 = vpop.f32.mrb[0].mxu0
  %v1148 = vadd.f32 %v118, %v1147
  %v1149 = vpop.f32.mrb[0].mxu0
  %1150 = vdwg.mxu0
  %v1151 = vadd.f32 %v1148, %v211
  %v1153 = vsel %vm134, %v1151, 0
  %1155 = vmatprep.subr.mxu0 0.0
  %1156 = vmatpush1.msra.mxu0 %v44
  %1157 = vmatprep.subr.mxu0 0.0
  %1158 = vmatpush1.msra.mxu0 %v45
  %1159 = vmatprep.subr.mxu0 0.0
  %1160 = vmatpush1.msra.mxu0 0.0
  %1161 = vmatprep.subr.mxu0 0.0
  %1162 = vmatpush1.msra.mxu0 0.0
  %1163 = vmatprep.subr.mxu0 0.0
  %1164 = vmatpush1.msra.mxu0 0.0
  %1165 = vmatprep.subr.mxu0 0.0
  %1166 = vmatpush1.msra.mxu0 0.0
  %1167 = vmatprep.subr.mxu0 0.0
  %1168 = vmatpush1.msra.mxu0 0.0
  %1169 = vmatprep.subr.mxu0 0.0
  %1170 = vmatpush1.msra.mxu0 0.0
  %1171 = vmatprep.subr.mxu0 0.0
  %1172 = vmatpush1.msra.mxu0 0.0
  %1173 = vmatprep.subr.mxu0 0.0
  %1174 = vmatpush1.msra.mxu0 0.0
  %1175 = vmatprep.subr.mxu0 0.0
  %1176 = vmatpush1.msra.mxu0 0.0
  %1177 = vmatprep.subr.mxu0 0.0
  %1178 = vmatpush1.msra.mxu0 0.0
  %1179 = vmatprep.subr.mxu0 0.0
  %1180 = vmatpush1.msra.mxu0 0.0
  %1181 = vmatprep.subr.mxu0 0.0
  %1182 = vmatpush1.msra.mxu0 0.0
  %1183 = vmatprep.subr.mxu0 0.0
  %1184 = vmatpush1.msra.mxu0 0.0
  %1185 = vmatprep.subr.mxu0 0.0
  %1186 = vmatpush1.msra.mxu0 0.0
  %1187 = vmatprep.subr.mxu0 0.0
  %1188 = vmatpush1.msra.mxu0 0.0
  %1189 = vmatprep.subr.mxu0 0.0
  %1190 = vmatpush1.msra.mxu0 0.0
  %1191 = vmatprep.subr.mxu0 0.0
  %1192 = vmatpush1.msra.mxu0 0.0
  %1193 = vmatprep.subr.mxu0 0.0
  %1194 = vmatpush1.msra.mxu0 0.0
  %1195 = vmatprep.subr.mxu0 0.0
  %1196 = vmatpush1.msra.mxu0 0.0
  %1197 = vmatprep.subr.mxu0 0.0
  %1198 = vmatpush1.msra.mxu0 0.0
  %1199 = vmatprep.subr.mxu0 0.0
  %1200 = vmatpush1.msra.mxu0 0.0
  %1201 = vmatprep.subr.mxu0 0.0
  %1202 = vmatpush1.msra.mxu0 0.0
  %1203 = vmatprep.subr.mxu0 0.0
  %1204 = vmatpush1.msra.mxu0 0.0
  %1205 = vmatprep.subr.mxu0 0.0
  %1206 = vmatpush1.msra.mxu0 0.0
  %1207 = vmatprep.subr.mxu0 0.0
  %1208 = vmatpush1.msra.mxu0 0.0
  %1209 = vmatprep.subr.mxu0 0.0
  %1210 = vmatpush1.msra.mxu0 0.0
  %1211 = vmatprep.subr.mxu0 0.0
  %1212 = vmatpush1.msra.mxu0 0.0
  %1213 = vmatprep.subr.mxu0 0.0
  %1214 = vmatpush1.msra.mxu0 0.0
  %1215 = vmatprep.subr.mxu0 0.0
  %1216 = vmatpush1.msra.mxu0 0.0
  %1217 = vmatprep.subr.mxu0 0.0
  %1218 = vmatpush1.msra.mxu0 0.0
  %1219 = vmatprep.mubr.f32.mxu0 0.0
  %1220 = vmatmul.mubr.f32.gmra.mrb[0].mxu0 %v1153
  %v1221 = vpop.f32.mrb[0].mxu0
  %v1222 = vadd.f32 0.0, %v1221
  %v1223 = vpop.f32.mrb[0].mxu0
  %1224 = vdwg.mxu0
  %v1225 = vsel %vm134, %v1222, -inf
  %1226 = vmax.xlane.f32.xlu0 %v1225
  %v1227 = vpop.xlane.xlu0 %1226
  %v1228 = vsub.f32 %v1222, %v1227
  %v1229 = vmul.f32 %v1228, 1.442695
  %v1230 = vpow.pop %v1229
  %v1231 = vsel %vm134, %v1230, 0.0
  %1232 = vadd.xlane.f32.xlu0 %v1231
  %v1233 = vpop.xlane.xlu0 %1232
  %v1234 = vrcp.pop %v1233
  %v1235 = vmul.f32 %v1230, %v1234
  %v1236 = vmul.f32 %v1222, %v1235
  %v1237 = vsel %vm134, %v1236, 0.0
  %1238 = vadd.xlane.f32.xlu0 %v1237
  %v1239 = vpop.xlane.xlu0 %1238
  %v1240 = vmul.f32 %v898, %v488
  %1242 = vrot.lane.b32.xlu0 %v1240, 96
  %v1243 = vpop.permute.xlu0 %1242
  %v1245 = vsel %vm47, %v1243, 0.0
  %1246 = vadd.xlane.f32.xlu0 %v1245
  %v1247 = vpop.xlane.xlu0 %1246
  %v1248 = vmul.f32 %v899, %v500
  %1250 = vrot.lane.b32.xlu0 %v1248, 96
  %v1251 = vpop.permute.xlu0 %1250
  %v1253 = vsel %vm47, %v1251, 0.0
  %1254 = vadd.xlane.f32.xlu0 %v1253
  %v1255 = vpop.xlane.xlu0 %1254
  %v1256 = vadd.f32 %v1247, %v1255
  %vm1257 = vcmp.eq.s32.totalorder %v130, 5
  %v1258 = vsel %vm1257, 1, 0
  %vm1259 = vcmp.eq.s32.totalorder %v1258, 1
  %v1260 = vsel %vm1259, %v1239, %v1075
  %v1261 = vsel %vm1259, %v1256, %v1076
  %1262 = vrot.lane.b32.xlu0 %v131, 32
  %v1263 = vpop.permute.xlu0 %1262
  %v1264 = vsel %vm134, %v1263, 0
  %1266 = vmatprep.subr.mxu0 0.0
  %1267 = vmatpush1.msra.mxu0 %v42
  %1268 = vmatprep.subr.mxu0 0.0
  %1269 = vmatpush1.msra.mxu0 %v43
  %1270 = vmatprep.subr.mxu0 0.0
  %1271 = vmatpush1.msra.mxu0 0.0
  %1272 = vmatprep.subr.mxu0 0.0
  %1273 = vmatpush1.msra.mxu0 0.0
  %1274 = vmatprep.subr.mxu0 0.0
  %1275 = vmatpush1.msra.mxu0 0.0
  %1276 = vmatprep.subr.mxu0 0.0
  %1277 = vmatpush1.msra.mxu0 0.0
  %1278 = vmatprep.subr.mxu0 0.0
  %1279 = vmatpush1.msra.mxu0 0.0
  %1280 = vmatprep.subr.mxu0 0.0
  %1281 = vmatpush1.msra.mxu0 0.0
  %1282 = vmatprep.subr.mxu0 0.0
  %1283 = vmatpush1.msra.mxu0 0.0
  %1284 = vmatprep.subr.mxu0 0.0
  %1285 = vmatpush1.msra.mxu0 0.0
  %1286 = vmatprep.subr.mxu0 0.0
  %1287 = vmatpush1.msra.mxu0 0.0
  %1288 = vmatprep.subr.mxu0 0.0
  %1289 = vmatpush1.msra.mxu0 0.0
  %1290 = vmatprep.subr.mxu0 0.0
  %1291 = vmatpush1.msra.mxu0 0.0
  %1292 = vmatprep.subr.mxu0 0.0
  %1293 = vmatpush1.msra.mxu0 0.0
  %1294 = vmatprep.subr.mxu0 0.0
  %1295 = vmatpush1.msra.mxu0 0.0
  %1296 = vmatprep.subr.mxu0 0.0
  %1297 = vmatpush1.msra.mxu0 0.0
  %1298 = vmatprep.subr.mxu0 0.0
  %1299 = vmatpush1.msra.mxu0 0.0
  %1300 = vmatprep.subr.mxu0 0.0
  %1301 = vmatpush1.msra.mxu0 0.0
  %1302 = vmatprep.subr.mxu0 0.0
  %1303 = vmatpush1.msra.mxu0 0.0
  %1304 = vmatprep.subr.mxu0 0.0
  %1305 = vmatpush1.msra.mxu0 0.0
  %1306 = vmatprep.subr.mxu0 0.0
  %1307 = vmatpush1.msra.mxu0 0.0
  %1308 = vmatprep.subr.mxu0 0.0
  %1309 = vmatpush1.msra.mxu0 0.0
  %1310 = vmatprep.subr.mxu0 0.0
  %1311 = vmatpush1.msra.mxu0 0.0
  %1312 = vmatprep.subr.mxu0 0.0
  %1313 = vmatpush1.msra.mxu0 0.0
  %1314 = vmatprep.subr.mxu0 0.0
  %1315 = vmatpush1.msra.mxu0 0.0
  %1316 = vmatprep.subr.mxu0 0.0
  %1317 = vmatpush1.msra.mxu0 0.0
  %1318 = vmatprep.subr.mxu0 0.0
  %1319 = vmatpush1.msra.mxu0 0.0
  %1320 = vmatprep.subr.mxu0 0.0
  %1321 = vmatpush1.msra.mxu0 0.0
  %1322 = vmatprep.subr.mxu0 0.0
  %1323 = vmatpush1.msra.mxu0 0.0
  %1324 = vmatprep.subr.mxu0 0.0
  %1325 = vmatpush1.msra.mxu0 0.0
  %1326 = vmatprep.subr.mxu0 0.0
  %1327 = vmatpush1.msra.mxu0 0.0
  %1328 = vmatprep.subr.mxu0 0.0
  %1329 = vmatpush1.msra.mxu0 0.0
  %1330 = vmatprep.mubr.f32.mxu0 0.0
  %1331 = vmatmul.mubr.f32.gmra.mrb[0].mxu0 %v1264
  %v1332 = vpop.f32.mrb[0].mxu0
  %v1333 = vadd.f32 %v118, %v1332
  %v1334 = vpop.f32.mrb[0].mxu0
  %1335 = vdwg.mxu0
  %v1336 = vadd.f32 %v1333, %v211
  %v1338 = vsel %vm134, %v1336, 0
  %1340 = vmatprep.subr.mxu0 0.0
  %1341 = vmatpush1.msra.mxu0 %v44
  %1342 = vmatprep.subr.mxu0 0.0
  %1343 = vmatpush1.msra.mxu0 %v45
  %1344 = vmatprep.subr.mxu0 0.0
  %1345 = vmatpush1.msra.mxu0 0.0
  %1346 = vmatprep.subr.mxu0 0.0
  %1347 = vmatpush1.msra.mxu0 0.0
  %1348 = vmatprep.subr.mxu0 0.0
  %1349 = vmatpush1.msra.mxu0 0.0
  %1350 = vmatprep.subr.mxu0 0.0
  %1351 = vmatpush1.msra.mxu0 0.0
  %1352 = vmatprep.subr.mxu0 0.0
  %1353 = vmatpush1.msra.mxu0 0.0
  %1354 = vmatprep.subr.mxu0 0.0
  %1355 = vmatpush1.msra.mxu0 0.0
  %1356 = vmatprep.subr.mxu0 0.0
  %1357 = vmatpush1.msra.mxu0 0.0
  %1358 = vmatprep.subr.mxu0 0.0
  %1359 = vmatpush1.msra.mxu0 0.0
  %1360 = vmatprep.subr.mxu0 0.0
  %1361 = vmatpush1.msra.mxu0 0.0
  %1362 = vmatprep.subr.mxu0 0.0
  %1363 = vmatpush1.msra.mxu0 0.0
  %1364 = vmatprep.subr.mxu0 0.0
  %1365 = vmatpush1.msra.mxu0 0.0
  %1366 = vmatprep.subr.mxu0 0.0
  %1367 = vmatpush1.msra.mxu0 0.0
  %1368 = vmatprep.subr.mxu0 0.0
  %1369 = vmatpush1.msra.mxu0 0.0
  %1370 = vmatprep.subr.mxu0 0.0
  %1371 = vmatpush1.msra.mxu0 0.0
  %1372 = vmatprep.subr.mxu0 0.0
  %1373 = vmatpush1.msra.mxu0 0.0
  %1374 = vmatprep.subr.mxu0 0.0
  %1375 = vmatpush1.msra.mxu0 0.0
  %1376 = vmatprep.subr.mxu0 0.0
  %1377 = vmatpush1.msra.mxu0 0.0
  %1378 = vmatprep.subr.mxu0 0.0
  %1379 = vmatpush1.msra.mxu0 0.0
  %1380 = vmatprep.subr.mxu0 0.0
  %1381 = vmatpush1.msra.mxu0 0.0
  %1382 = vmatprep.subr.mxu0 0.0
  %1383 = vmatpush1.msra.mxu0 0.0
  %1384 = vmatprep.subr.mxu0 0.0
  %1385 = vmatpush1.msra.mxu0 0.0
  %1386 = vmatprep.subr.mxu0 0.0
  %1387 = vmatpush1.msra.mxu0 0.0
  %1388 = vmatprep.subr.mxu0 0.0
  %1389 = vmatpush1.msra.mxu0 0.0
  %1390 = vmatprep.subr.mxu0 0.0
  %1391 = vmatpush1.msra.mxu0 0.0
  %1392 = vmatprep.subr.mxu0 0.0
  %1393 = vmatpush1.msra.mxu0 0.0
  %1394 = vmatprep.subr.mxu0 0.0
  %1395 = vmatpush1.msra.mxu0 0.0
  %1396 = vmatprep.subr.mxu0 0.0
  %1397 = vmatpush1.msra.mxu0 0.0
  %1398 = vmatprep.subr.mxu0 0.0
  %1399 = vmatpush1.msra.mxu0 0.0
  %1400 = vmatprep.subr.mxu0 0.0
  %1401 = vmatpush1.msra.mxu0 0.0
  %1402 = vmatprep.subr.mxu0 0.0
  %1403 = vmatpush1.msra.mxu0 0.0
  %1404 = vmatprep.mubr.f32.mxu0 0.0
  %1405 = vmatmul.mubr.f32.gmra.mrb[0].mxu0 %v1338
  %v1406 = vpop.f32.mrb[0].mxu0
  %v1407 = vadd.f32 0.0, %v1406
  %v1408 = vpop.f32.mrb[0].mxu0
  %1409 = vdwg.mxu0
  %v1410 = vsel %vm134, %v1407, -inf
  %1411 = vmax.xlane.f32.xlu0 %v1410
  %v1412 = vpop.xlane.xlu0 %1411
  %v1413 = vsub.f32 %v1407, %v1412
  %v1414 = vmul.f32 %v1413, 1.442695
  %v1415 = vpow.pop %v1414
  %v1416 = vsel %vm134, %v1415, 0.0
  %1417 = vadd.xlane.f32.xlu0 %v1416
  %v1418 = vpop.xlane.xlu0 %1417
  %v1419 = vrcp.pop %v1418
  %v1420 = vmul.f32 %v1415, %v1419
  %v1421 = vmul.f32 %v1407, %v1420
  %v1422 = vsel %vm134, %v1421, 0.0
  %1423 = vadd.xlane.f32.xlu0 %v1422
  %v1424 = vpop.xlane.xlu0 %1423
  %v1425 = vmul.f32 %v898, %v680
  %1427 = vrot.lane.b32.xlu0 %v1425, 64
  %v1428 = vpop.permute.xlu0 %1427
  %v1430 = vsel %vm47, %v1428, 0.0
  %1431 = vadd.xlane.f32.xlu0 %v1430
  %v1432 = vpop.xlane.xlu0 %1431
  %v1433 = vmul.f32 %v899, %v691
  %1435 = vrot.lane.b32.xlu0 %v1433, 64
  %v1436 = vpop.permute.xlu0 %1435
  %v1438 = vsel %vm47, %v1436, 0.0
  %1439 = vadd.xlane.f32.xlu0 %v1438
  %v1440 = vpop.xlane.xlu0 %1439
  %v1441 = vadd.f32 %v1432, %v1440
  %vm1442 = vcmp.eq.s32.totalorder %v130, 6
  %v1443 = vsel %vm1442, 1, 0
  %vm1444 = vcmp.eq.s32.totalorder %v1443, 1
  %v1445 = vsel %vm1444, %v1424, %v1260
  %v1446 = vsel %vm1444, %v1441, %v1261
  %1447 = vrot.lane.b32.xlu0 %v131, 16
  %v1448 = vpop.permute.xlu0 %1447
  %v1449 = vsel %vm134, %v1448, 0
  %1451 = vmatprep.subr.mxu0 0.0
  %1452 = vmatpush1.msra.mxu0 %v42
  %1453 = vmatprep.subr.mxu0 0.0
  %1454 = vmatpush1.msra.mxu0 %v43
  %1455 = vmatprep.subr.mxu0 0.0
  %1456 = vmatpush1.msra.mxu0 0.0
  %1457 = vmatprep.subr.mxu0 0.0
  %1458 = vmatpush1.msra.mxu0 0.0
  %1459 = vmatprep.subr.mxu0 0.0
  %1460 = vmatpush1.msra.mxu0 0.0
  %1461 = vmatprep.subr.mxu0 0.0
  %1462 = vmatpush1.msra.mxu0 0.0
  %1463 = vmatprep.subr.mxu0 0.0
  %1464 = vmatpush1.msra.mxu0 0.0
  %1465 = vmatprep.subr.mxu0 0.0
  %1466 = vmatpush1.msra.mxu0 0.0
  %1467 = vmatprep.subr.mxu0 0.0
  %1468 = vmatpush1.msra.mxu0 0.0
  %1469 = vmatprep.subr.mxu0 0.0
  %1470 = vmatpush1.msra.mxu0 0.0
  %1471 = vmatprep.subr.mxu0 0.0
  %1472 = vmatpush1.msra.mxu0 0.0
  %1473 = vmatprep.subr.mxu0 0.0
  %1474 = vmatpush1.msra.mxu0 0.0
  %1475 = vmatprep.subr.mxu0 0.0
  %1476 = vmatpush1.msra.mxu0 0.0
  %1477 = vmatprep.subr.mxu0 0.0
  %1478 = vmatpush1.msra.mxu0 0.0
  %1479 = vmatprep.subr.mxu0 0.0
  %1480 = vmatpush1.msra.mxu0 0.0
  %1481 = vmatprep.subr.mxu0 0.0
  %1482 = vmatpush1.msra.mxu0 0.0
  %1483 = vmatprep.subr.mxu0 0.0
  %1484 = vmatpush1.msra.mxu0 0.0
  %1485 = vmatprep.subr.mxu0 0.0
  %1486 = vmatpush1.msra.mxu0 0.0
  %1487 = vmatprep.subr.mxu0 0.0
  %1488 = vmatpush1.msra.mxu0 0.0
  %1489 = vmatprep.subr.mxu0 0.0
  %1490 = vmatpush1.msra.mxu0 0.0
  %1491 = vmatprep.subr.mxu0 0.0
  %1492 = vmatpush1.msra.mxu0 0.0
  %1493 = vmatprep.subr.mxu0 0.0
  %1494 = vmatpush1.msra.mxu0 0.0
  %1495 = vmatprep.subr.mxu0 0.0
  %1496 = vmatpush1.msra.mxu0 0.0
  %1497 = vmatprep.subr.mxu0 0.0
  %1498 = vmatpush1.msra.mxu0 0.0
  %1499 = vmatprep.subr.mxu0 0.0
  %1500 = vmatpush1.msra.mxu0 0.0
  %1501 = vmatprep.subr.mxu0 0.0
  %1502 = vmatpush1.msra.mxu0 0.0
  %1503 = vmatprep.subr.mxu0 0.0
  %1504 = vmatpush1.msra.mxu0 0.0
  %1505 = vmatprep.subr.mxu0 0.0
  %1506 = vmatpush1.msra.mxu0 0.0
  %1507 = vmatprep.subr.mxu0 0.0
  %1508 = vmatpush1.msra.mxu0 0.0
  %1509 = vmatprep.subr.mxu0 0.0
  %1510 = vmatpush1.msra.mxu0 0.0
  %1511 = vmatprep.subr.mxu0 0.0
  %1512 = vmatpush1.msra.mxu0 0.0
  %1513 = vmatprep.subr.mxu0 0.0
  %1514 = vmatpush1.msra.mxu0 0.0
  %1515 = vmatprep.mubr.f32.mxu0 0.0
  %1516 = vmatmul.mubr.f32.gmra.mrb[0].mxu0 %v1449
  %v1517 = vpop.f32.mrb[0].mxu0
  %v1518 = vadd.f32 %v118, %v1517
  %v1519 = vpop.f32.mrb[0].mxu0
  %1520 = vdwg.mxu0
  %v1521 = vadd.f32 %v1518, %v211
  %v1523 = vsel %vm134, %v1521, 0
  %1525 = vmatprep.subr.mxu0 0.0
  %1526 = vmatpush1.msra.mxu0 %v44
  %1527 = vmatprep.subr.mxu0 0.0
  %1528 = vmatpush1.msra.mxu0 %v45
  %1529 = vmatprep.subr.mxu0 0.0
  %1530 = vmatpush1.msra.mxu0 0.0
  %1531 = vmatprep.subr.mxu0 0.0
  %1532 = vmatpush1.msra.mxu0 0.0
  %1533 = vmatprep.subr.mxu0 0.0
  %1534 = vmatpush1.msra.mxu0 0.0
  %1535 = vmatprep.subr.mxu0 0.0
  %1536 = vmatpush1.msra.mxu0 0.0
  %1537 = vmatprep.subr.mxu0 0.0
  %1538 = vmatpush1.msra.mxu0 0.0
  %1539 = vmatprep.subr.mxu0 0.0
  %1540 = vmatpush1.msra.mxu0 0.0
  %1541 = vmatprep.subr.mxu0 0.0
  %1542 = vmatpush1.msra.mxu0 0.0
  %1543 = vmatprep.subr.mxu0 0.0
  %1544 = vmatpush1.msra.mxu0 0.0
  %1545 = vmatprep.subr.mxu0 0.0
  %1546 = vmatpush1.msra.mxu0 0.0
  %1547 = vmatprep.subr.mxu0 0.0
  %1548 = vmatpush1.msra.mxu0 0.0
  %1549 = vmatprep.subr.mxu0 0.0
  %1550 = vmatpush1.msra.mxu0 0.0
  %1551 = vmatprep.subr.mxu0 0.0
  %1552 = vmatpush1.msra.mxu0 0.0
  %1553 = vmatprep.subr.mxu0 0.0
  %1554 = vmatpush1.msra.mxu0 0.0
  %1555 = vmatprep.subr.mxu0 0.0
  %1556 = vmatpush1.msra.mxu0 0.0
  %1557 = vmatprep.subr.mxu0 0.0
  %1558 = vmatpush1.msra.mxu0 0.0
  %1559 = vmatprep.subr.mxu0 0.0
  %1560 = vmatpush1.msra.mxu0 0.0
  %1561 = vmatprep.subr.mxu0 0.0
  %1562 = vmatpush1.msra.mxu0 0.0
  %1563 = vmatprep.subr.mxu0 0.0
  %1564 = vmatpush1.msra.mxu0 0.0
  %1565 = vmatprep.subr.mxu0 0.0
  %1566 = vmatpush1.msra.mxu0 0.0
  %1567 = vmatprep.subr.mxu0 0.0
  %1568 = vmatpush1.msra.mxu0 0.0
  %1569 = vmatprep.subr.mxu0 0.0
  %1570 = vmatpush1.msra.mxu0 0.0
  %1571 = vmatprep.subr.mxu0 0.0
  %1572 = vmatpush1.msra.mxu0 0.0
  %1573 = vmatprep.subr.mxu0 0.0
  %1574 = vmatpush1.msra.mxu0 0.0
  %1575 = vmatprep.subr.mxu0 0.0
  %1576 = vmatpush1.msra.mxu0 0.0
  %1577 = vmatprep.subr.mxu0 0.0
  %1578 = vmatpush1.msra.mxu0 0.0
  %1579 = vmatprep.subr.mxu0 0.0
  %1580 = vmatpush1.msra.mxu0 0.0
  %1581 = vmatprep.subr.mxu0 0.0
  %1582 = vmatpush1.msra.mxu0 0.0
  %1583 = vmatprep.subr.mxu0 0.0
  %1584 = vmatpush1.msra.mxu0 0.0
  %1585 = vmatprep.subr.mxu0 0.0
  %1586 = vmatpush1.msra.mxu0 0.0
  %1587 = vmatprep.subr.mxu0 0.0
  %1588 = vmatpush1.msra.mxu0 0.0
  %1589 = vmatprep.mubr.f32.mxu0 0.0
  %1590 = vmatmul.mubr.f32.gmra.mrb[0].mxu0 %v1523
  %v1591 = vpop.f32.mrb[0].mxu0
  %v1592 = vadd.f32 0.0, %v1591
  %v1593 = vpop.f32.mrb[0].mxu0
  %1594 = vdwg.mxu0
  %v1595 = vsel %vm134, %v1592, -inf
  %1596 = vmax.xlane.f32.xlu0 %v1595
  %v1597 = vpop.xlane.xlu0 %1596
  %v1598 = vsub.f32 %v1592, %v1597
  %v1599 = vmul.f32 %v1598, 1.442695
  %v1600 = vpow.pop %v1599
  %v1601 = vsel %vm134, %v1600, 0.0
  %1602 = vadd.xlane.f32.xlu0 %v1601
  %v1603 = vpop.xlane.xlu0 %1602
  %v1604 = vrcp.pop %v1603
  %v1605 = vmul.f32 %v1600, %v1604
  %v1606 = vmul.f32 %v1592, %v1605
  %v1607 = vsel %vm134, %v1606, 0.0
  %1608 = vadd.xlane.f32.xlu0 %v1607
  %v1609 = vpop.xlane.xlu0 %1608
  %v1610 = vmul.f32 %v898, %v871
  %1612 = vrot.lane.b32.xlu0 %v1610, 32
  %v1613 = vpop.permute.xlu0 %1612
  %v1615 = vsel %vm47, %v1613, 0.0
  %1616 = vadd.xlane.f32.xlu0 %v1615
  %v1617 = vpop.xlane.xlu0 %1616
  %v1618 = vmul.f32 %v899, %v882
  %1620 = vrot.lane.b32.xlu0 %v1618, 32
  %v1621 = vpop.permute.xlu0 %1620
  %v1623 = vsel %vm47, %v1621, 0.0
  %1624 = vadd.xlane.f32.xlu0 %v1623
  %v1625 = vpop.xlane.xlu0 %1624
  %v1626 = vadd.f32 %v1617, %v1625
  %vm1627 = vcmp.eq.s32.totalorder %v130, 7
  %v1628 = vsel %vm1627, 1, 0
  %vm1629 = vcmp.eq.s32.totalorder %v1628, 1
  %v1630 = vsel %vm1629, %v1609, %v1445
  %v1631 = vsel %vm1629, %v1626, %v1446
  %vm1632 = vcmask 64512
  %v1634 = vsel %vm1632, %v1630, 0
  %1636 = vmatprep.subr.mxu0 0.0
  %1637 = vmatpush1.msra.mxu0 %v46
  %1638 = vmatprep.subr.mxu0 0.0
  %1639 = vmatpush1.msra.mxu0 0.0
  %1640 = vmatprep.subr.mxu0 0.0
  %1641 = vmatpush1.msra.mxu0 0.0
  %1642 = vmatprep.subr.mxu0 0.0
  %1643 = vmatpush1.msra.mxu0 0.0
  %1644 = vmatprep.subr.mxu0 0.0
  %1645 = vmatpush1.msra.mxu0 0.0
  %1646 = vmatprep.subr.mxu0 0.0
  %1647 = vmatpush1.msra.mxu0 0.0
  %1648 = vmatprep.subr.mxu0 0.0
  %1649 = vmatpush1.msra.mxu0 0.0
  %1650 = vmatprep.subr.mxu0 0.0
  %1651 = vmatpush1.msra.mxu0 0.0
  %1652 = vmatprep.subr.mxu0 0.0
  %1653 = vmatpush1.msra.mxu0 0.0
  %1654 = vmatprep.subr.mxu0 0.0
  %1655 = vmatpush1.msra.mxu0 0.0
  %1656 = vmatprep.subr.mxu0 0.0
  %1657 = vmatpush1.msra.mxu0 0.0
  %1658 = vmatprep.subr.mxu0 0.0
  %1659 = vmatpush1.msra.mxu0 0.0
  %1660 = vmatprep.subr.mxu0 0.0
  %1661 = vmatpush1.msra.mxu0 0.0
  %1662 = vmatprep.subr.mxu0 0.0
  %1663 = vmatpush1.msra.mxu0 0.0
  %1664 = vmatprep.subr.mxu0 0.0
  %1665 = vmatpush1.msra.mxu0 0.0
  %1666 = vmatprep.subr.mxu0 0.0
  %1667 = vmatpush1.msra.mxu0 0.0
  %1668 = vmatprep.subr.mxu0 0.0
  %1669 = vmatpush1.msra.mxu0 0.0
  %1670 = vmatprep.subr.mxu0 0.0
  %1671 = vmatpush1.msra.mxu0 0.0
  %1672 = vmatprep.subr.mxu0 0.0
  %1673 = vmatpush1.msra.mxu0 0.0
  %1674 = vmatprep.subr.mxu0 0.0
  %1675 = vmatpush1.msra.mxu0 0.0
  %1676 = vmatprep.subr.mxu0 0.0
  %1677 = vmatpush1.msra.mxu0 0.0
  %1678 = vmatprep.subr.mxu0 0.0
  %1679 = vmatpush1.msra.mxu0 0.0
  %1680 = vmatprep.subr.mxu0 0.0
  %1681 = vmatpush1.msra.mxu0 0.0
  %1682 = vmatprep.subr.mxu0 0.0
  %1683 = vmatpush1.msra.mxu0 0.0
  %1684 = vmatprep.subr.mxu0 0.0
  %1685 = vmatpush1.msra.mxu0 0.0
  %1686 = vmatprep.subr.mxu0 0.0
  %1687 = vmatpush1.msra.mxu0 0.0
  %1688 = vmatprep.subr.mxu0 0.0
  %1689 = vmatpush1.msra.mxu0 0.0
  %1690 = vmatprep.subr.mxu0 0.0
  %1691 = vmatpush1.msra.mxu0 0.0
  %1692 = vmatprep.subr.mxu0 0.0
  %1693 = vmatpush1.msra.mxu0 0.0
  %1694 = vmatprep.subr.mxu0 0.0
  %1695 = vmatpush1.msra.mxu0 0.0
  %1696 = vmatprep.subr.mxu0 0.0
  %1697 = vmatpush1.msra.mxu0 0.0
  %1698 = vmatprep.subr.mxu0 0.0
  %1699 = vmatpush1.msra.mxu0 0.0
  %1700 = vmatprep.mubr.f32.mxu0 0.0
  %1701 = vmatmul.mubr.f32.gmra.mrb[0].mxu0 %v1634
  %v1702 = vpop.f32.mrb[0].mxu0
  %v1703 = vadd.f32 0.0, %v1702
  %v1704 = vpop.f32.mrb[0].mxu0
  %1705 = vdwg.mxu0
  %v1706 = vadd.f32 %v128, %v1631
  %v1707 = vadd.f32 %v1706, %v1703
  %v1708 = vlaneseq
  %v1709 = vshrl.u32 %v1708, 7
  %v1710 = vsub.s32 3, %v1709
  %v1711 = vrot.slane %v37, %v1710
  %v1712 = vadd.f32 %v1707, %v1711
  %v1713 = vlaneseq
  %v1714 = vshrl.u32 %v1713, 7
  %v1715 = vsub.s32 4, %v1714
  %v1716 = vrot.slane %v37, %v1715
  %v1717 = vmul.f32 %v1712, %v1716
  %v1718 = vsel %vm1632, %v1717, -inf
  %1719 = vmax.xlane.f32.xlu0 %v1718
  %v1720 = vpop.xlane.xlu0 %1719
  %v1721 = vsub.f32 %v1717, %v1720
  %v1722 = vmul.f32 %v1721, 1.442695
  %v1723 = vpow.pop %v1722
  %v1724 = vsel %vm1632, %v1723, 0.0
  %1725 = vadd.xlane.f32.xlu0 %v1724
  %v1726 = vpop.xlane.xlu0 %1725
  %v1727 = vrcp.pop %v1726
  %v1728 = vmul.f32 %v1723, %v1727
  %1730 = vset.pattern.permute.xlu0 0
  %1731 = vperm.xlu0 %1730, %v1728
  %v1732 = vpop.permute.xlu0 %1731
  %v1734 = vmul.f32 %v1732, %v133
  %v1735 = vadd.f32 %v35, %v1734
  %1736 = vset.pattern.permute.xlu0 1
  %1737 = vperm.xlu0 %1736, %v1728
  %v1738 = vpop.permute.xlu0 %1737
  %v1740 = vmul.f32 %v1738, %v133
  %1742 = vrot.lane.b32.xlu0 %v1740, 96
  %v1743 = vpop.permute.xlu0 %1742
  %v1745 = vadd.f32 %v1735, %v1743
  %1746 = vset.pattern.permute.xlu0 2
  %1747 = vperm.xlu0 %1746, %v1728
  %v1748 = vpop.permute.xlu0 %1747
  %v1750 = vmul.f32 %v1748, %v133
  %1752 = vrot.lane.b32.xlu0 %v1750, 64
  %v1753 = vpop.permute.xlu0 %1752
  %v1755 = vadd.f32 %v1745, %v1753
  %1756 = vset.pattern.permute.xlu0 3
  %1757 = vperm.xlu0 %1756, %v1728
  %v1758 = vpop.permute.xlu0 %1757
  %v1760 = vmul.f32 %v1758, %v133
  %1762 = vrot.lane.b32.xlu0 %v1760, 32
  %v1763 = vpop.permute.xlu0 %1762
  %v1765 = vadd.f32 %v1755, %v1763
  %1766 = vset.pattern.permute.xlu0 4
  %1767 = vperm.xlu0 %1766, %v1728
  %v1768 = vpop.permute.xlu0 %1767
  %v1770 = vmul.f32 %v1768, %v899
  %v1771 = vadd.f32 %v1765, %v1770
  %1772 = vset.pattern.permute.xlu0 5
  %1773 = vperm.xlu0 %1772, %v1728
  %v1774 = vpop.permute.xlu0 %1773
  %v1776 = vmul.f32 %v1774, %v899
  %1778 = vrot.lane.b32.xlu0 %v1776, 96
  %v1779 = vpop.permute.xlu0 %1778
  %v1781 = vadd.f32 %v1771, %v1779
  %1782 = vset.pattern.permute.xlu0 6
  %1783 = vperm.xlu0 %1782, %v1728
  %v1784 = vpop.permute.xlu0 %1783
  %v1786 = vmul.f32 %v1784, %v899
  %1788 = vrot.lane.b32.xlu0 %v1786, 64
  %v1789 = vpop.permute.xlu0 %1788
  %v1791 = vadd.f32 %v1781, %v1789
  %1792 = vset.pattern.permute.xlu0 7
  %1793 = vperm.xlu0 %1792, %v1728
  %v1794 = vpop.permute.xlu0 %1793
  %v1796 = vmul.f32 %v1794, %v899
  %1798 = vrot.lane.b32.xlu0 %v1796, 32
  %v1799 = vpop.permute.xlu0 %1798
  %v1801 = vadd.f32 %v1791, %v1799
  %v1802 = vmul.f32 %v1801, %v132
  %v1803 = vsel %vm47, %v1802, 0.0
  %1804 = vadd.xlane.f32.xlu0 %v1803
  %v1805 = vpop.xlane.xlu0 %1804
  %v1806 = vmul.f32 %v1801, %v898
  %v1807 = vsel %vm47, %v1806, 0.0
  %1808 = vadd.xlane.f32.xlu0 %v1807
  %v1809 = vpop.xlane.xlu0 %1808
  %v1810 = vmul.f32 %v1805, %v36
  %v1811 = vmul.f32 %v1809, %v36
  %1813 = vrot.lane.b32.xlu0 %v1811, 124
  %v1814 = vpop.permute.xlu0 %1813
  %v1816 = vsub.f32 %v1810, %v1814
  %vm1817 = vcmp.ge.f32.partialorder %v1816, 0.0
  %v1818 = vsub.f32 0.0, %v1816
  %v1819 = vmul.f32 %v1818, 1.442695
  %v1820 = vpow.pop %v1819
  %v1821 = vadd.f32 %v1820, 1.0
  %v1822 = vlog2.pop %v1821
  %v1823 = vmul.f32 %v1822, 0.6931472
  %v1824 = vmul.f32 -0.5, %v1820
  %v1825 = vadd.f32 %v1824, 1.0
  %v1826 = vmul.f32 %v1825, %v1820
  %v1827 = vand.u32 2147483647, %v1820
  %vm1828 = vcmp.lt.f32.partialorder %v1827, 0.0004427343
  %v1829 = vsel %vm1828, %v1826, %v1823
  %v1830 = vsub.f32 0.0, %v1829
  %v1831 = vmul.f32 %v1816, 1.442695
  %v1832 = vpow.pop %v1831
  %v1833 = vadd.f32 %v1832, 1.0
  %v1834 = vlog2.pop %v1833
  %v1835 = vmul.f32 %v1834, 0.6931472
  %v1836 = vmul.f32 -0.5, %v1832
  %v1837 = vadd.f32 %v1836, 1.0
  %v1838 = vmul.f32 %v1837, %v1832
  %v1839 = vand.u32 2147483647, %v1832
  %vm1840 = vcmp.lt.f32.partialorder %v1839, 0.0004427343
  %v1841 = vsel %vm1840, %v1838, %v1835
  %v1842 = vsub.f32 %v1816, %v1841
  %v1843 = vsel %vm1817, %v1830, %v1842
  %v1844 = vadd.f32 %v1843, 0.0
  %1846 = vrot.lane.b32.xlu0 %v132, 96
  %v1847 = vpop.permute.xlu0 %1846
  %v1849 = vmul.f32 %v1801, %v1847
  %v1850 = vsel %vm47, %v1849, 0.0
  %1851 = vadd.xlane.f32.xlu0 %v1850
  %v1852 = vpop.xlane.xlu0 %1851
  %1854 = vrot.lane.b32.xlu0 %v898, 96
  %v1855 = vpop.permute.xlu0 %1854
  %v1857 = vmul.f32 %v1801, %v1855
  %v1858 = vsel %vm47, %v1857, 0.0
  %1859 = vadd.xlane.f32.xlu0 %v1858
  %v1860 = vpop.xlane.xlu0 %1859
  %v1861 = vmul.f32 %v1852, %v36
  %v1862 = vmul.f32 %v1860, %v36
  %1864 = vrot.lane.b32.xlu0 %v1862, 124
  %v1865 = vpop.permute.xlu0 %1864
  %v1867 = vsub.f32 %v1861, %v1865
  %vm1868 = vcmp.ge.f32.partialorder %v1867, 0.0
  %v1869 = vsub.f32 0.0, %v1867
  %v1870 = vmul.f32 %v1869, 1.442695
  %v1871 = vpow.pop %v1870
  %v1872 = vadd.f32 %v1871, 1.0
  %v1873 = vlog2.pop %v1872
  %v1874 = vmul.f32 %v1873, 0.6931472
  %v1875 = vmul.f32 -0.5, %v1871
  %v1876 = vadd.f32 %v1875, 1.0
  %v1877 = vmul.f32 %v1876, %v1871
  %v1878 = vand.u32 2147483647, %v1871
  %vm1879 = vcmp.lt.f32.partialorder %v1878, 0.0004427343
  %v1880 = vsel %vm1879, %v1877, %v1874
  %v1881 = vsub.f32 0.0, %v1880
  %v1882 = vmul.f32 %v1867, 1.442695
  %v1883 = vpow.pop %v1882
  %v1884 = vadd.f32 %v1883, 1.0
  %v1885 = vlog2.pop %v1884
  %v1886 = vmul.f32 %v1885, 0.6931472
  %v1887 = vmul.f32 -0.5, %v1883
  %v1888 = vadd.f32 %v1887, 1.0
  %v1889 = vmul.f32 %v1888, %v1883
  %v1890 = vand.u32 2147483647, %v1883
  %vm1891 = vcmp.lt.f32.partialorder %v1890, 0.0004427343
  %v1892 = vsel %vm1891, %v1889, %v1886
  %v1893 = vsub.f32 %v1867, %v1892
  %v1894 = vsel %vm1868, %v1881, %v1893
  %1896 = vrot.lane.b32.xlu0 %v1894, 127
  %v1897 = vpop.permute.xlu0 %1896
  %v1899 = vadd.f32 %v1844, %v1897
  %1900 = vrot.lane.b32.xlu0 %v132, 64
  %v1901 = vpop.permute.xlu0 %1900
  %v1903 = vmul.f32 %v1801, %v1901
  %v1904 = vsel %vm47, %v1903, 0.0
  %1905 = vadd.xlane.f32.xlu0 %v1904
  %v1906 = vpop.xlane.xlu0 %1905
  %1907 = vrot.lane.b32.xlu0 %v898, 64
  %v1908 = vpop.permute.xlu0 %1907
  %v1910 = vmul.f32 %v1801, %v1908
  %v1911 = vsel %vm47, %v1910, 0.0
  %1912 = vadd.xlane.f32.xlu0 %v1911
  %v1913 = vpop.xlane.xlu0 %1912
  %v1914 = vmul.f32 %v1906, %v36
  %v1915 = vmul.f32 %v1913, %v36
  %1917 = vrot.lane.b32.xlu0 %v1915, 124
  %v1918 = vpop.permute.xlu0 %1917
  %v1920 = vsub.f32 %v1914, %v1918
  %vm1921 = vcmp.ge.f32.partialorder %v1920, 0.0
  %v1922 = vsub.f32 0.0, %v1920
  %v1923 = vmul.f32 %v1922, 1.442695
  %v1924 = vpow.pop %v1923
  %v1925 = vadd.f32 %v1924, 1.0
  %v1926 = vlog2.pop %v1925
  %v1927 = vmul.f32 %v1926, 0.6931472
  %v1928 = vmul.f32 -0.5, %v1924
  %v1929 = vadd.f32 %v1928, 1.0
  %v1930 = vmul.f32 %v1929, %v1924
  %v1931 = vand.u32 2147483647, %v1924
  %vm1932 = vcmp.lt.f32.partialorder %v1931, 0.0004427343
  %v1933 = vsel %vm1932, %v1930, %v1927
  %v1934 = vsub.f32 0.0, %v1933
  %v1935 = vmul.f32 %v1920, 1.442695
  %v1936 = vpow.pop %v1935
  %v1937 = vadd.f32 %v1936, 1.0
  %v1938 = vlog2.pop %v1937
  %v1939 = vmul.f32 %v1938, 0.6931472
  %v1940 = vmul.f32 -0.5, %v1936
  %v1941 = vadd.f32 %v1940, 1.0
  %v1942 = vmul.f32 %v1941, %v1936
  %v1943 = vand.u32 2147483647, %v1936
  %vm1944 = vcmp.lt.f32.partialorder %v1943, 0.0004427343
  %v1945 = vsel %vm1944, %v1942, %v1939
  %v1946 = vsub.f32 %v1920, %v1945
  %v1947 = vsel %vm1921, %v1934, %v1946
  %1949 = vrot.lane.b32.xlu0 %v1947, 126
  %v1950 = vpop.permute.xlu0 %1949
  %v1952 = vadd.f32 %v1899, %v1950
  %1953 = vrot.lane.b32.xlu0 %v132, 32
  %v1954 = vpop.permute.xlu0 %1953
  %v1956 = vmul.f32 %v1801, %v1954
  %v1957 = vsel %vm47, %v1956, 0.0
  %1958 = vadd.xlane.f32.xlu0 %v1957
  %v1959 = vpop.xlane.xlu0 %1958
  %1960 = vrot.lane.b32.xlu0 %v898, 32
  %v1961 = vpop.permute.xlu0 %1960
  %v1963 = vmul.f32 %v1801, %v1961
  %v1964 = vsel %vm47, %v1963, 0.0
  %1965 = vadd.xlane.f32.xlu0 %v1964
  %v1966 = vpop.xlane.xlu0 %1965
  %v1967 = vmul.f32 %v1959, %v36
  %v1968 = vmul.f32 %v1966, %v36
  %1970 = vrot.lane.b32.xlu0 %v1968, 124
  %v1971 = vpop.permute.xlu0 %1970
  %v1973 = vsub.f32 %v1967, %v1971
  %vm1974 = vcmp.ge.f32.partialorder %v1973, 0.0
  %v1975 = vsub.f32 0.0, %v1973
  %v1976 = vmul.f32 %v1975, 1.442695
  %v1977 = vpow.pop %v1976
  %v1978 = vadd.f32 %v1977, 1.0
  %v1979 = vlog2.pop %v1978
  %v1980 = vmul.f32 %v1979, 0.6931472
  %v1981 = vmul.f32 -0.5, %v1977
  %v1982 = vadd.f32 %v1981, 1.0
  %v1983 = vmul.f32 %v1982, %v1977
  %v1984 = vand.u32 2147483647, %v1977
  %vm1985 = vcmp.lt.f32.partialorder %v1984, 0.0004427343
  %v1986 = vsel %vm1985, %v1983, %v1980
  %v1987 = vsub.f32 0.0, %v1986
  %v1988 = vmul.f32 %v1973, 1.442695
  %v1989 = vpow.pop %v1988
  %v1990 = vadd.f32 %v1989, 1.0
  %v1991 = vlog2.pop %v1990
  %v1992 = vmul.f32 %v1991, 0.6931472
  %v1993 = vmul.f32 -0.5, %v1989
  %v1994 = vadd.f32 %v1993, 1.0
  %v1995 = vmul.f32 %v1994, %v1989
  %v1996 = vand.u32 2147483647, %v1989
  %vm1997 = vcmp.lt.f32.partialorder %v1996, 0.0004427343
  %v1998 = vsel %vm1997, %v1995, %v1992
  %v1999 = vsub.f32 %v1973, %v1998
  %v2000 = vsel %vm1974, %v1987, %v1999
  %2002 = vrot.lane.b32.xlu0 %v2000, 125
  %v2003 = vpop.permute.xlu0 %2002
  %v2005 = vadd.f32 %v1952, %v2003
  %s2006 = smul.u32 0, 8
  %v2007 = vlaneseq
  %v2008 = vshrl.u32 %v2007, 7
  %v2009 = vstv %s2006
  %v2010 = vadd.s32 %v2009, %v2008
  %vm2011 = vcmp.lt.s32.totalorder %v2010, 4
  %v2012 = vsel %vm2011, 1, 0
  %v2013 = vcvt.s32.f32 %v2012
  %v2014 = vmul.f32 %v2005, %v2013
  %v2015 = vsub.f32 0.0, %v2014
  %vm2016 = vcmask 7168
  %2017 = vst.msk [vmem:[%s10] sm:$0xff] %vm2016, %v2015
  // Predicated region
  $region42: #{acf_forward.1} parent=0 // pred_check
    _
  $region43: #{acf_forward.1} parent=0 // pred_check_branch
    %2019 = sbr.rel (0) target = $region45
  $region44: #{acf_forward.1} parent=0 // pred_region
    _
  $region45: #{acf_forward.1} parent=0 // pred_fallthru
    _
  // Predicated region
  $region46: #{acf_forward.1} parent=0 // pred_check
    _
  $region47: #{acf_forward.1} parent=0 // pred_check_branch
    %2021 = sbr.rel (0) target = $region49
  $region48: #{acf_forward.1} parent=0 // pred_region
    _
  $region49: #{acf_forward.1} parent=0 // pred_fallthru
    _

</llo_original>
